<compile_context>
chip_gen: v7x
topology: tpu7x:2x2x1
jax: 0.10.0
libtpu: 0.0.40
codegen_flags: <defaults>
</compile_context>

<pallas_src>
import functools

import jax
import jax.numpy as jnp
from jax.experimental import pallas as pl
from jax.experimental.pallas import tpu as pltpu

LN_EPS = 1e-5                    # torch.nn.LayerNorm default
MXU_DTYPE = jnp.bfloat16         # matmul-operand dtype (f32 accumulation)


# ---------------------------------------------------------------- helpers ---
def _layernorm(x, g, b):
    mu = jnp.mean(x, axis=-1, keepdims=True)
    var = jnp.mean((x - mu) ** 2, axis=-1, keepdims=True)
    return (x - mu) * jax.lax.rsqrt(var + LN_EPS) * g + b


# ------------------------------------------------------------------ kernel --
def _attention_kernel(x_ref, lng_ref, lnb_ref, wqkv_ref, wo_ref, bo_ref,
                      o_ref, *, heads, dim_head):
    n, _ = x_ref.shape
    inner = heads * dim_head

    x = x_ref[...]                                        # (n, dim) f32
    h = _layernorm(x, lng_ref[...], lnb_ref[...])         # (n, dim) f32

    # Fused QKV: one lane-dense (n, dim) @ (dim, 3*inner) MXU pass.
    qkv = jnp.dot(h.astype(MXU_DTYPE), wqkv_ref[...],
                  preferred_element_type=jnp.float32)
    qkv = qkv.astype(MXU_DTYPE)                           # single cast for q/k/v

    # 'n (h d)' -> '(h) n d'   (softmax scale is pre-folded into the Q slice)
    q = qkv[:, 0 * inner:1 * inner].reshape(n, heads, dim_head).transpose(1, 0, 2)
    k = qkv[:, 1 * inner:2 * inner].reshape(n, heads, dim_head).transpose(1, 0, 2)
    v = qkv[:, 2 * inner:3 * inner].reshape(n, heads, dim_head).transpose(1, 0, 2)

    # attention scores + softmax (numerically stable; EUP reciprocal)
    dots = jnp.einsum('hnd,hmd->hnm', q, k,
                      preferred_element_type=jnp.float32)          # (h, n, n)
    dots = dots - jnp.max(dots, axis=-1, keepdims=True)
    p = jnp.exp(dots)
    attn = p * pl.reciprocal(jnp.sum(p, axis=-1, keepdims=True), approx=True)

    ctx = jnp.einsum('hnm,hmd->hnd', attn.astype(MXU_DTYPE), v,
                     preferred_element_type=jnp.float32)           # (h, n, dh)

    # 'h n d -> n (h d)' then one (n, inner) @ (inner, dim) output projection.
    ctx2 = ctx.transpose(1, 0, 2).reshape(n, inner)
    out = jnp.dot(ctx2.astype(MXU_DTYPE), wo_ref[...],
                  preferred_element_type=jnp.float32) + bo_ref[...]
    # dropout p=0.0 -> identity
    o_ref[...] = out.astype(o_ref.dtype)


# --------------------------------------------------------------- wrapper ----
def attention_forward(params, x, *, heads, dim_head):
    b, n, dim = x.shape
    inner = heads * dim_head

    kernel = functools.partial(_attention_kernel, heads=heads, dim_head=dim_head)
    c2 = lambda i: (0, 0)
    b3 = lambda i: (i, 0, 0)

    return pl.pallas_call(
        kernel,
        grid=(b,),
        in_specs=[
            pl.BlockSpec((None, n, dim), b3),        # x        (per-sample)
            pl.BlockSpec((1, dim), c2),              # ln gamma
            pl.BlockSpec((1, dim), c2),              # ln beta
            pl.BlockSpec((dim, 3 * inner), c2),      # fused W_qkv
            pl.BlockSpec((inner, dim), c2),          # W_out
            pl.BlockSpec((1, dim), c2),              # b_out
        ],
        out_specs=pl.BlockSpec((None, n, dim), b3),
        out_shape=jax.ShapeDtypeStruct((b, n, dim), jnp.float32),
        compiler_params=pltpu.CompilerParams(
            dimension_semantics=("parallel",)),      # one sample per TC on v7x
    )(x, params["ln_g"], params["ln_b"], params["w_qkv"], params["w_o"],
      params["b_o"])


# ------------------------------------------------------------ parameters ----
def init_params(key, *, dim, heads, dim_head):
    inner = heads * dim_head
    scale = float(dim_head) ** -0.5
    k1, k2 = jax.random.split(key)

    w_qkv = 0.02 * jax.random.normal(k1, (dim, 3 * inner), dtype=jnp.float32)
    # fold the softmax scale into the Q slice (f32, before the bf16 cast)
    w_qkv = w_qkv.at[:, :inner].multiply(scale)
    w_o = 0.02 * jax.random.normal(k2, (inner, dim), dtype=jnp.float32)

    return {
        "ln_g": jnp.ones((1, dim), jnp.float32),
        "ln_b": jnp.zeros((1, dim), jnp.float32),
        "w_qkv": w_qkv.astype(MXU_DTYPE),
        "w_o": w_o.astype(MXU_DTYPE),
        "b_o": jnp.zeros((1, dim), jnp.float32),
    }


# ------------------------------------------------------ pure-JAX reference --
def attention_ref(params, x, *, heads, dim_head):
    b, n, dim = x.shape
    inner = heads * dim_head
    w_qkv = params["w_qkv"].astype(jnp.float32)      # scale already folded
    w_o = params["w_o"].astype(jnp.float32)

    h = _layernorm(x, params["ln_g"], params["ln_b"])
    qkv = h @ w_qkv
    q, k, v = jnp.split(qkv, 3, axis=-1)

    def split_heads(t):
        return t.reshape(b, n, heads, dim_head).transpose(0, 2, 1, 3)

    q, k, v = map(split_heads, (q, k, v))
    dots = jnp.einsum('bhnd,bhmd->bhnm', q, k)
    attn = jax.nn.softmax(dots, axis=-1)
    out = jnp.einsum('bhnm,bhmd->bhnd', attn, v)
    out = out.transpose(0, 2, 1, 3).reshape(b, n, inner)
    return out @ w_o + params["b_o"]


# ------------------------------------------------------------------ main ----
if __name__ == "__main__":
    B, N = 2, 8                  # batch, sequence length (sublane-aligned)
    DIM = 128                    # model dim (lane-dense)
    HEADS, DIM_HEAD = 4, 32      # inner = 128

    key = jax.random.PRNGKey(0)
    pkey, xkey = jax.random.split(key)
    params = init_params(pkey, dim=DIM, heads=HEADS, dim_head=DIM_HEAD)
    x = jax.random.normal(xkey, (B, N, DIM), dtype=jnp.float32)

    fwd = jax.jit(functools.partial(attention_forward,
                                    heads=HEADS, dim_head=DIM_HEAD))
    out = fwd(params, x)
    jax.block_until_ready(out)

    ref = attention_ref(params, x, heads=HEADS, dim_head=DIM_HEAD)
    assert out.shape == (B, N, DIM)
    assert bool(jnp.all(jnp.isfinite(out)))
    max_err = float(jnp.max(jnp.abs(out - ref)))
    # bf16 matmul operands + approx reciprocal -> small, bounded divergence
    assert max_err < 2e-2, f"max abs err {max_err}"
    print("KERNEL_OK")
</pallas_src>

<mosaic_0001>
module attributes {stable_mosaic.version = 11 : i64} {
  func.func @_attention_kernel(%arg0: i32, %arg1: memref<1x8x128xf32, #tpu.memory_space<vmem>>, %arg2: memref<1x128xf32, #tpu.memory_space<vmem>>, %arg3: memref<1x128xf32, #tpu.memory_space<vmem>>, %arg4: memref<128x384xbf16, #tpu.memory_space<vmem>>, %arg5: memref<128x128xbf16, #tpu.memory_space<vmem>>, %arg6: memref<1x128xf32, #tpu.memory_space<vmem>>, %arg7: memref<1x8x128xf32, #tpu.memory_space<vmem>>) attributes {dimension_semantics = [#tpu.dimension_semantics<parallel>], iteration_bounds = array<i64: 2>, scalar_prefetch = 0 : i64, scratch_operands = 0 : i64, tpu.core_type = #tpu.core_type<tc>, window_params = [{transform_indices = @transform_0, window_bounds = array<i64: 1, 8, 128>}, {pipeline_mode = #tpu.pipeline_mode<synchronous>, transform_indices = @transform_1, window_bounds = array<i64: 1, 128>}, {pipeline_mode = #tpu.pipeline_mode<synchronous>, transform_indices = @transform_2, window_bounds = array<i64: 1, 128>}, {pipeline_mode = #tpu.pipeline_mode<synchronous>, transform_indices = @transform_3, window_bounds = array<i64: 128, 384>}, {pipeline_mode = #tpu.pipeline_mode<synchronous>, transform_indices = @transform_4, window_bounds = array<i64: 128, 128>}, {pipeline_mode = #tpu.pipeline_mode<synchronous>, transform_indices = @transform_5, window_bounds = array<i64: 1, 128>}, {transform_indices = @transform_6, window_bounds = array<i64: 1, 8, 128>}]} {
    %c0 = arith.constant 0 : index
    %c0_0 = arith.constant 0 : index
    %c0_1 = arith.constant 0 : index
    %0 = vector.load %arg1[%c0, %c0_0, %c0_1] : memref<1x8x128xf32, #tpu.memory_space<vmem>>, vector<1x8x128xf32>
    %1 = vector.shape_cast %0 : vector<1x8x128xf32> to vector<8x128xf32>
    %c0_2 = arith.constant 0 : index
    %c0_3 = arith.constant 0 : index
    %2 = vector.load %arg2[%c0_2, %c0_3] : memref<1x128xf32, #tpu.memory_space<vmem>>, vector<1x128xf32>
    %c0_4 = arith.constant 0 : index
    %c0_5 = arith.constant 0 : index
    %3 = vector.load %arg3[%c0_4, %c0_5] : memref<1x128xf32, #tpu.memory_space<vmem>>, vector<1x128xf32>
    %cst = arith.constant dense<0.000000e+00> : vector<8xf32>
    %4 = vector.multi_reduction <add>, %1, %cst [1] : vector<8x128xf32> to vector<8xf32>
    %5 = vector.shape_cast %4 : vector<8xf32> to vector<8x1xf32>
    %cst_6 = arith.constant 1.280000e+02 : f32
    %6 = vector.broadcast %cst_6 : f32 to vector<8x1xf32>
    %7 = arith.divf %5, %6 : vector<8x1xf32>
    %8 = vector.broadcast %7 : vector<8x1xf32> to vector<8x128xf32>
    %9 = arith.subf %1, %8 : vector<8x128xf32>
    %10 = arith.mulf %9, %9 : vector<8x128xf32>
    %cst_7 = arith.constant dense<0.000000e+00> : vector<8xf32>
    %11 = vector.multi_reduction <add>, %10, %cst_7 [1] : vector<8x128xf32> to vector<8xf32>
    %12 = vector.shape_cast %11 : vector<8xf32> to vector<8x1xf32>
    %cst_8 = arith.constant 1.280000e+02 : f32
    %13 = vector.broadcast %cst_8 : f32 to vector<8x1xf32>
    %14 = arith.divf %12, %13 : vector<8x1xf32>
    %15 = vector.broadcast %7 : vector<8x1xf32> to vector<8x128xf32>
    %16 = arith.subf %1, %15 : vector<8x128xf32>
    %cst_9 = arith.constant 9.99999974E-6 : f32
    %17 = vector.broadcast %cst_9 : f32 to vector<8x1xf32>
    %18 = arith.addf %14, %17 : vector<8x1xf32>
    %19 = math.rsqrt %18 : vector<8x1xf32>
    %20 = vector.broadcast %19 : vector<8x1xf32> to vector<8x128xf32>
    %21 = arith.mulf %16, %20 : vector<8x128xf32>
    %22 = vector.broadcast %2 : vector<1x128xf32> to vector<8x128xf32>
    %23 = arith.mulf %21, %22 : vector<8x128xf32>
    %24 = vector.broadcast %3 : vector<1x128xf32> to vector<8x128xf32>
    %25 = arith.addf %23, %24 : vector<8x128xf32>
    %26 = arith.truncf %25 : vector<8x128xf32> to vector<8x128xbf16>
    %c0_10 = arith.constant 0 : index
    %c0_11 = arith.constant 0 : index
    %27 = vector.load %arg4[%c0_10, %c0_11] : memref<128x384xbf16, #tpu.memory_space<vmem>>, vector<128x384xbf16>
    %cst_12 = arith.constant dense<0.000000e+00> : vector<8x384xf32>
    %28 = tpu.matmul %26, %27, %cst_12 {dimension_numbers = #tpu.dot_dimension_numbers<[1], [0], [0], [1], [0, 0, 1, 1], [], []>} : vector<8x128xbf16>, vector<128x384xbf16>, vector<8x384xf32> -> vector<8x384xf32>
    %29 = arith.truncf %28 : vector<8x384xf32> to vector<8x384xbf16>
    %30 = vector.extract_strided_slice %29 {offsets = [0, 0], sizes = [8, 128], strides = [1, 1]} : vector<8x384xbf16> to vector<8x128xbf16>
    %31 = vector.shape_cast %30 : vector<8x128xbf16> to vector<8x4x32xbf16>
    %32 = tpu.transpose %31, [1, 0, 2] : vector<8x4x32xbf16> -> vector<4x8x32xbf16>
    %33 = vector.extract_strided_slice %29 {offsets = [0, 128], sizes = [8, 128], strides = [1, 1]} : vector<8x384xbf16> to vector<8x128xbf16>
    %34 = vector.shape_cast %33 : vector<8x128xbf16> to vector<8x4x32xbf16>
    %35 = tpu.transpose %34, [1, 0, 2] : vector<8x4x32xbf16> -> vector<4x8x32xbf16>
    %36 = vector.extract_strided_slice %29 {offsets = [0, 256], sizes = [8, 128], strides = [1, 1]} : vector<8x384xbf16> to vector<8x128xbf16>
    %37 = vector.shape_cast %36 : vector<8x128xbf16> to vector<8x4x32xbf16>
    %38 = tpu.transpose %37, [1, 0, 2] : vector<8x4x32xbf16> -> vector<4x8x32xbf16>
    "tpu.trace_start"() <{level = 10 : i32, message = "hnd,hmd->hnm"}> : () -> ()
    %cst_13 = arith.constant dense<0.000000e+00> : vector<4x8x8xf32>
    %39 = tpu.matmul %32, %35, %cst_13 {dimension_numbers = #tpu.dot_dimension_numbers<[2], [2], [1], [1], [0, 0, 0, 1, 1, 1], [0], [0]>} : vector<4x8x32xbf16>, vector<4x8x32xbf16>, vector<4x8x8xf32> -> vector<4x8x8xf32>
    "tpu.trace_stop"() : () -> ()
    %cst_14 = arith.constant dense<0xFF800000> : vector<4x8xf32>
    %40 = vector.multi_reduction <maximumf>, %39, %cst_14 [2] : vector<4x8x8xf32> to vector<4x8xf32>
    %41 = vector.shape_cast %40 : vector<4x8xf32> to vector<4x8x1xf32>
    %42 = vector.broadcast %41 : vector<4x8x1xf32> to vector<4x8x8xf32>
    %43 = arith.subf %39, %42 : vector<4x8x8xf32>
    %44 = math.exp %43 : vector<4x8x8xf32>
    %cst_15 = arith.constant dense<0.000000e+00> : vector<4x8xf32>
    %45 = vector.multi_reduction <add>, %44, %cst_15 [2] : vector<4x8x8xf32> to vector<4x8xf32>
    %46 = vector.shape_cast %45 : vector<4x8xf32> to vector<4x8x1xf32>
    %47 = tpu.reciprocal %46 {approx = true} : vector<4x8x1xf32> -> vector<4x8x1xf32>
    %48 = vector.broadcast %47 : vector<4x8x1xf32> to vector<4x8x8xf32>
    %49 = arith.mulf %44, %48 : vector<4x8x8xf32>
    %50 = arith.truncf %49 : vector<4x8x8xf32> to vector<4x8x8xbf16>
    "tpu.trace_start"() <{level = 10 : i32, message = "hnm,hmd->hnd"}> : () -> ()
    %cst_16 = arith.constant dense<0.000000e+00> : vector<4x8x32xf32>
    %51 = tpu.matmul %50, %38, %cst_16 {dimension_numbers = #tpu.dot_dimension_numbers<[2], [1], [1], [2], [0, 0, 0, 1, 1, 2], [0], [0]>} : vector<4x8x8xbf16>, vector<4x8x32xbf16>, vector<4x8x32xf32> -> vector<4x8x32xf32>
    "tpu.trace_stop"() : () -> ()
    %52 = tpu.transpose %51, [1, 0, 2] : vector<4x8x32xf32> -> vector<8x4x32xf32>
    %53 = vector.shape_cast %52 : vector<8x4x32xf32> to vector<8x128xf32>
    %54 = arith.truncf %53 : vector<8x128xf32> to vector<8x128xbf16>
    %c0_17 = arith.constant 0 : index
    %c0_18 = arith.constant 0 : index
    %55 = vector.load %arg5[%c0_17, %c0_18] : memref<128x128xbf16, #tpu.memory_space<vmem>>, vector<128x128xbf16>
    %cst_19 = arith.constant dense<0.000000e+00> : vector<8x128xf32>
    %56 = tpu.matmul %54, %55, %cst_19 {dimension_numbers = #tpu.dot_dimension_numbers<[1], [0], [0], [1], [0, 0, 1, 1], [], []>} : vector<8x128xbf16>, vector<128x128xbf16>, vector<8x128xf32> -> vector<8x128xf32>
    %c0_20 = arith.constant 0 : index
    %c0_21 = arith.constant 0 : index
    %57 = vector.load %arg6[%c0_20, %c0_21] : memref<1x128xf32, #tpu.memory_space<vmem>>, vector<1x128xf32>
    %58 = vector.broadcast %57 : vector<1x128xf32> to vector<8x128xf32>
    %59 = arith.addf %56, %58 : vector<8x128xf32>
    %c0_22 = arith.constant 0 : index
    %c0_23 = arith.constant 0 : index
    %c0_24 = arith.constant 0 : index
    %60 = vector.load %arg7[%c0_22, %c0_23, %c0_24] : memref<1x8x128xf32, #tpu.memory_space<vmem>>, vector<1x8x128xf32>
    %61 = vector.shape_cast %60 : vector<1x8x128xf32> to vector<8x128xf32>
    %62 = vector.shape_cast %59 : vector<8x128xf32> to vector<1x8x128xf32>
    tpu.vector_store %arg7[%c0_22, %c0_23, %c0_24], %62 {strides = array<i32>} : memref<1x8x128xf32, #tpu.memory_space<vmem>>, vector<1x8x128xf32>,
    return
  }
  func.func @transform_0(%arg0: i32) -> (i32, i32, i32) {
    %c0_i32 = arith.constant 0 : i32
    %c0_i32_0 = arith.constant 0 : i32
    %c0_i32_1 = arith.constant 0 : i32
    return %arg0, %c0_i32, %c0_i32_0 : i32, i32, i32
  }
  func.func @transform_1(%arg0: i32) -> (i32, i32) {
    %c0_i32 = arith.constant 0 : i32
    %c0_i32_0 = arith.constant 0 : i32
    %c0_i32_1 = arith.constant 0 : i32
    return %c0_i32, %c0_i32_0 : i32, i32
  }
  func.func @transform_2(%arg0: i32) -> (i32, i32) {
    %c0_i32 = arith.constant 0 : i32
    %c0_i32_0 = arith.constant 0 : i32
    %c0_i32_1 = arith.constant 0 : i32
    return %c0_i32, %c0_i32_0 : i32, i32
  }
  func.func @transform_3(%arg0: i32) -> (i32, i32) {
    %c0_i32 = arith.constant 0 : i32
    %c0_i32_0 = arith.constant 0 : i32
    %c0_i32_1 = arith.constant 0 : i32
    return %c0_i32, %c0_i32_0 : i32, i32
  }
  func.func @transform_4(%arg0: i32) -> (i32, i32) {
    %c0_i32 = arith.constant 0 : i32
    %c0_i32_0 = arith.constant 0 : i32
    %c0_i32_1 = arith.constant 0 : i32
    return %c0_i32, %c0_i32_0 : i32, i32
  }
  func.func @transform_5(%arg0: i32) -> (i32, i32) {
    %c0_i32 = arith.constant 0 : i32
    %c0_i32_0 = arith.constant 0 : i32
    %c0_i32_1 = arith.constant 0 : i32
    return %c0_i32, %c0_i32_0 : i32, i32
  }
  func.func @transform_6(%arg0: i32) -> (i32, i32, i32) {
    %c0_i32 = arith.constant 0 : i32
    %c0_i32_0 = arith.constant 0 : i32
    %c0_i32_1 = arith.constant 0 : i32
    return %arg0, %c0_i32, %c0_i32_0 : i32, i32, i32
  }
}

</mosaic_0001>

<llo_original>
// kernel: attention_forward.1
$region0: #{attention_forward.1}
  #allocation0 [shape = 'u32[]', space=smem, size = 0x4, offset = 0x4, fixed_abs, tag = 'smem constant byte address 0x4 - core index']
  #allocation1 [shape = 'u32[144,128]{1,0:T(1,128)}', space=vmem, size = 0x12000, scoped, tag = 'internal scratch']
  %s0 = inlined_call_operand.vmem [shape: f32[2,8,128], index: 0, kind: input, shape index: {}]
  %s1 = inlined_call_operand.vmem [shape: f32[1,128], index: 1, kind: input, shape index: {}]
  %s2 = inlined_call_operand.vmem [shape: f32[1,128], index: 2, kind: input, shape index: {}]
  %s3 = inlined_call_operand.hbm [shape: bf16[128,384], index: 3, kind: input, shape index: {}]
  %s4 = inlined_call_operand.hbm [shape: bf16[128,128], index: 4, kind: input, shape index: {}]
  %s5 = inlined_call_operand.hbm [shape: f32[1,128], index: 5, kind: input, shape index: {}]
  %s6 = inlined_call_operand.hbm [shape: f32[2,8,128], index: 6, kind: output, shape index: {}]
  %s7 = sld [smem:[#allocation0]]
  $region69: #{attention_forward.1} parent=0
    _
  %s9 = ssub.s32 1, %s7
  %s10 = scalar_select 0, %s9, %s7
  $region1: #{attention_forward.1} parent=0
    #allocation2 [shape = 'u8[98304]{0}', space=vmem, size = 0x18000, scoped, tag = 'input window, operand 3, single buffered']
    #allocation3 [shape = 's32[2]{0}', space=sflag, size = 0x8, scoped, tag = 'scoped memory for attention_forward.1']
    #allocation4 [shape = 's32[2]{0}', space=sflag, size = 0x8, scoped, tag = 'scoped memory for attention_forward.1']
    #allocation5 [shape = 'u8[32768]{0}', space=vmem, size = 0x8000, scoped, tag = 'input window, operand 4, single buffered']
    #allocation6 [shape = 's32[1]{0}', space=sflag, size = 0x4, scoped, tag = 'scoped memory for attention_forward.1']
    #allocation7 [shape = 'u8[512]{0}', space=vmem, size = 0x400, scoped, tag = 'input window, operand 5, single buffered']
    #allocation8 [shape = 'u8[8192]{0}', space=vmem, size = 0x2000, scoped, tag = 'output window, operand 0']
    %11 = vsyncpa [#allocation3], 0
    %12 = vsyncpa [#allocation6], 0
    %13 = vsyncpa [#allocation4], 0
    %s14 = scalar_lea.sflag [#allocation4], 1
    %15 = vsyncpa %s14, 0
    loop: start=0, step=1, limit=4
    $region2: #{attention_forward.1} parent=1 // loop_pre_header
      _
    $region3: #{attention_forward.1} parent=1 // loop_header
      %s17 = sphi 0, %s21
      %p18 = scmp.ge.s32.totalorder %s17, 4
      %s27 = sphi 0, %s29
      %s30 = sphi 0, %s27
      %s31 = sphi 0, %s30
      %s47 = sphi 0, %s31
      %s51 = sphi 0, %s51
      %s53 = sphi 0, %s51
      %s54 = sphi 0, %s53
      %s68 = sphi 0, %s54
      %s72 = sphi 0, %s72
      %s74 = sphi 0, %s72
      %s75 = sphi 0, %s74
      %s89 = sphi 0, %s75
      %s93 = sphi 0, %s93
      %s95 = sphi 0, %s93
      %s96 = sphi 0, %s95
      %s110 = sphi 0, %s96
      %s114 = sphi 0, %s114
      %s116 = sphi 0, %s114
      %s117 = sphi 0, %s116
      %s131 = sphi 0, %s117
      %s135 = sphi 0, %s135
      %s137 = sphi 0, %s135
      %s138 = sphi 0, %s137
      %s152 = sphi 0, %s138
      %s158 = sphi 0, %s160
      %s161 = sphi 0, %s158
      %s162 = sphi 0, %s161
      %s178 = sphi 0, %s162
    $region4: #{attention_forward.1} parent=1 // loop_header_branch
      %20 = sbr.rel (%p18) target = $region8
    $region5: #{attention_forward.1} parent=1 // loop_body
      %s22 = ssub.s32 %s17, 1
      %s23 = ssub.s32 %s17, 2
      %s24 = sadd.s32 %s17, 1
      %s25 = ssub.s32 %s17, %s24
      %p26 = scmp.eq.s32.totalorder %s25, 0
      %s28 = sadd.s32 %s27, 1
      %s29 = scalar_select %p26, %s27, %s28
      %p32 = pneg %p26
      %p33 = scmp.eq.s32.totalorder %s17, 1
      %p34 = por %p32, %p33
      %p35 = scmp.ne.s32.totalorder %s27, %s30
      %p36 = scmp.eq.s32.totalorder %s17, 0
      %p37 = por %p35, %p36
      %p38 = scmp.ne.s32.totalorder %s27, %s30
      %p39 = scmp.eq.s32.totalorder %s22, 1
      %p40 = por %p38, %p39
      %p41 = scmp.ne.s32.totalorder %s30, %s31
      %p42 = scmp.eq.s32.totalorder %s22, 0
      %p43 = por %p41, %p42
      %p44 = scmp.ne.s32.totalorder %s30, %s31
      %p45 = scmp.eq.s32.totalorder %s23, 1
      %p46 = por %p44, %p45
      %p48 = scmp.ne.s32.totalorder %s31, %s47
      %p49 = scmp.eq.s32.totalorder %s23, 0
      %p50 = por %p48, %p49
      %s52 = sadd.s32 %s51, 1
      %p55 = scmp.eq.s32.totalorder %s17, 1
      %p56 = scmp.ne.s32.totalorder %s51, %s53
      %p57 = scmp.eq.s32.totalorder %s17, 0
      %p58 = por %p56, %p57
      %p59 = scmp.ne.s32.totalorder %s51, %s53
      %p60 = scmp.eq.s32.totalorder %s22, 1
      %p61 = por %p59, %p60
      %p62 = scmp.ne.s32.totalorder %s53, %s54
      %p63 = scmp.eq.s32.totalorder %s22, 0
      %p64 = por %p62, %p63
      %p65 = scmp.ne.s32.totalorder %s53, %s54
      %p66 = scmp.eq.s32.totalorder %s23, 1
      %p67 = por %p65, %p66
      %p69 = scmp.ne.s32.totalorder %s54, %s68
      %p70 = scmp.eq.s32.totalorder %s23, 0
      %p71 = por %p69, %p70
      %s73 = sadd.s32 %s72, 1
      %p76 = scmp.eq.s32.totalorder %s17, 1
      %p77 = scmp.ne.s32.totalorder %s72, %s74
      %p78 = scmp.eq.s32.totalorder %s17, 0
      %p79 = por %p77, %p78
      %p80 = scmp.ne.s32.totalorder %s72, %s74
      %p81 = scmp.eq.s32.totalorder %s22, 1
      %p82 = por %p80, %p81
      %p83 = scmp.ne.s32.totalorder %s74, %s75
      %p84 = scmp.eq.s32.totalorder %s22, 0
      %p85 = por %p83, %p84
      %p86 = scmp.ne.s32.totalorder %s74, %s75
      %p87 = scmp.eq.s32.totalorder %s23, 1
      %p88 = por %p86, %p87
      %p90 = scmp.ne.s32.totalorder %s75, %s89
      %p91 = scmp.eq.s32.totalorder %s23, 0
      %p92 = por %p90, %p91
      %s94 = sadd.s32 %s93, 1
      %p97 = scmp.eq.s32.totalorder %s17, 1
      %p98 = scmp.ne.s32.totalorder %s93, %s95
      %p99 = scmp.eq.s32.totalorder %s17, 0
      %p100 = por %p98, %p99
      %p101 = scmp.ne.s32.totalorder %s93, %s95
      %p102 = scmp.eq.s32.totalorder %s22, 1
      %p103 = por %p101, %p102
      %p104 = scmp.ne.s32.totalorder %s95, %s96
      %p105 = scmp.eq.s32.totalorder %s22, 0
      %p106 = por %p104, %p105
      %p107 = scmp.ne.s32.totalorder %s95, %s96
      %p108 = scmp.eq.s32.totalorder %s23, 1
      %p109 = por %p107, %p108
      %p111 = scmp.ne.s32.totalorder %s96, %s110
      %p112 = scmp.eq.s32.totalorder %s23, 0
      %p113 = por %p111, %p112
      %s115 = sadd.s32 %s114, 1
      %p118 = scmp.eq.s32.totalorder %s17, 1
      %p119 = scmp.ne.s32.totalorder %s114, %s116
      %p120 = scmp.eq.s32.totalorder %s17, 0
      %p121 = por %p119, %p120
      %p122 = scmp.ne.s32.totalorder %s114, %s116
      %p123 = scmp.eq.s32.totalorder %s22, 1
      %p124 = por %p122, %p123
      %p125 = scmp.ne.s32.totalorder %s116, %s117
      %p126 = scmp.eq.s32.totalorder %s22, 0
      %p127 = por %p125, %p126
      %p128 = scmp.ne.s32.totalorder %s116, %s117
      %p129 = scmp.eq.s32.totalorder %s23, 1
      %p130 = por %p128, %p129
      %p132 = scmp.ne.s32.totalorder %s117, %s131
      %p133 = scmp.eq.s32.totalorder %s23, 0
      %p134 = por %p132, %p133
      %s136 = sadd.s32 %s135, 1
      %p139 = scmp.eq.s32.totalorder %s17, 1
      %p140 = scmp.ne.s32.totalorder %s135, %s137
      %p141 = scmp.eq.s32.totalorder %s17, 0
      %p142 = por %p140, %p141
      %p143 = scmp.ne.s32.totalorder %s135, %s137
      %p144 = scmp.eq.s32.totalorder %s22, 1
      %p145 = por %p143, %p144
      %p146 = scmp.ne.s32.totalorder %s137, %s138
      %p147 = scmp.eq.s32.totalorder %s22, 0
      %p148 = por %p146, %p147
      %p149 = scmp.ne.s32.totalorder %s137, %s138
      %p150 = scmp.eq.s32.totalorder %s23, 1
      %p151 = por %p149, %p150
      %p153 = scmp.ne.s32.totalorder %s138, %s152
      %p154 = scmp.eq.s32.totalorder %s23, 0
      %p155 = por %p153, %p154
      %s156 = ssub.s32 %s17, %s24
      %p157 = scmp.eq.s32.totalorder %s156, 0
      %s159 = sadd.s32 %s158, 1
      %s160 = scalar_select %p157, %s158, %s159
      %p163 = pneg %p157
      %p164 = scmp.eq.s32.totalorder %s17, 1
      %p165 = por %p163, %p164
      %p166 = scmp.ne.s32.totalorder %s158, %s161
      %p167 = scmp.eq.s32.totalorder %s17, 0
      %p168 = por %p166, %p167
      %p169 = scmp.ne.s32.totalorder %s158, %s161
      %p170 = scmp.eq.s32.totalorder %s22, 1
      %p171 = por %p169, %p170
      %p172 = scmp.ne.s32.totalorder %s161, %s162
      %p173 = scmp.eq.s32.totalorder %s22, 0
      %p174 = por %p172, %p173
      %p175 = scmp.ne.s32.totalorder %s161, %s162
      %p176 = scmp.eq.s32.totalorder %s23, 1
      %p177 = por %p175, %p176
      %p179 = scmp.ne.s32.totalorder %s162, %s178
      %p180 = scmp.eq.s32.totalorder %s23, 0
      %p181 = por %p179, %p180
      %p182 = scmp.le.s32.totalorder 1, %s17
      %p183 = scmp.lt.s32.totalorder %s17, 3
      %p184 = pnand %p182, %p183
      %p185 = pneg %p184
      // Predicated region
      $region9: #{attention_forward.1} parent=5 // pred_check
        _
      $region10: #{attention_forward.1} parent=5 // pred_check_branch
        %187 = sbr.rel (%p184) target = $region12
      $region11: #{attention_forward.1} parent=5 // pred_region
        %s188 = ssub.s32 %s17, 1
        // Predicated region
        $region13: #{attention_forward.1} parent=11 // pred_check
          %p189 = pneg %p64
        $region14: #{attention_forward.1} parent=11 // pred_check_branch
          %191 = sbr.rel (%p189) target = $region16
        $region15: #{attention_forward.1} parent=11 // pred_region
          _
        $region16: #{attention_forward.1} parent=11 // pred_fallthru
          _
        // Predicated region
        $region17: #{attention_forward.1} parent=11 // pred_check
          %p192 = pneg %p85
        $region18: #{attention_forward.1} parent=11 // pred_check_branch
          %194 = sbr.rel (%p192) target = $region20
        $region19: #{attention_forward.1} parent=11 // pred_region
          _
        $region20: #{attention_forward.1} parent=11 // pred_fallthru
          _
        // Predicated region
        $region21: #{attention_forward.1} parent=11 // pred_check
          %p195 = pneg %p106
        $region22: #{attention_forward.1} parent=11 // pred_check_branch
          %197 = sbr.rel (%p195) target = $region24
        $region23: #{attention_forward.1} parent=11 // pred_region
          %s199 = ssub.s32 3072, 3072
          %200 = vsyncadd [#allocation3], %s199
          %s201 = sshll.u32 [#allocation2], 4
          %s202 = int_to_ptr.vmem [resolvable:$true] %s201
          %207 = dma.hbm_to_vmem [thread:$0]  %s3, 3072, %s202, [#allocation3], 192, 192, 12
        $region24: #{attention_forward.1} parent=11 // pred_fallthru
          _
        // Predicated region
        $region25: #{attention_forward.1} parent=11 // pred_check
          %p208 = pneg %p127
        $region26: #{attention_forward.1} parent=11 // pred_check_branch
          %210 = sbr.rel (%p208) target = $region28
        $region27: #{attention_forward.1} parent=11 // pred_region
          %s212 = ssub.s32 1024, 1024
          %213 = vsyncadd [#allocation6], %s212
          %s214 = sshll.u32 [#allocation5], 4
          %s215 = int_to_ptr.vmem [resolvable:$true] %s214
          %220 = dma.hbm_to_vmem [thread:$0]  %s4, 1024, %s215, [#allocation6], 64, 64, 4
        $region28: #{attention_forward.1} parent=11 // pred_fallthru
          _
        // Predicated region
        $region29: #{attention_forward.1} parent=11 // pred_check
          %p221 = pneg %p148
        $region30: #{attention_forward.1} parent=11 // pred_check_branch
          %223 = sbr.rel (%p221) target = $region32
        $region31: #{attention_forward.1} parent=11 // pred_region
          %s225 = ssub.s32 16, 16
          %226 = vsyncadd [#allocation6], %s225
          %s228 = sshll.u32 [#allocation7], 4
          %s229 = int_to_ptr.vmem [resolvable:$true] %s228
          %231 = dma.hbm_to_vmem [thread:$0]  %s5, 16, %s229, [#allocation6]
        $region32: #{attention_forward.1} parent=11 // pred_fallthru
          _
      $region12: #{attention_forward.1} parent=5 // pred_fallthru
        _
      %p232 = scmp.lt.s32.totalorder %s17, 2
      // Predicated region
      $region33: #{attention_forward.1} parent=5 // pred_check
        %p233 = pneg %p232
      $region34: #{attention_forward.1} parent=5 // pred_check_branch
        %235 = sbr.rel (%p233) target = $region36
      $region35: #{attention_forward.1} parent=5 // pred_region
        // Predicated region
        $region37: #{attention_forward.1} parent=35 // pred_check
          %p236 = pneg %p37
        $region38: #{attention_forward.1} parent=35 // pred_check_branch
          %238 = sbr.rel (%p236) target = $region40
        $region39: #{attention_forward.1} parent=35 // pred_region
          %p239 = scmp.lt.s32.totalorder %s17, 1
          %s240 = scalar_select %p239, %s17, 1
          %s241 = smul.addr %s240, 8
          %s242 = scalar_lea.vmem %s0, %s241
        $region40: #{attention_forward.1} parent=35 // pred_fallthru
          _
      $region36: #{attention_forward.1} parent=5 // pred_fallthru
        _
      %p243 = scmp.le.s32.totalorder 1, %s17
      %p244 = scmp.lt.s32.totalorder %s17, 3
      %p245 = pnand %p243, %p244
      %p246 = pneg %p245
      // Predicated region
      $region41: #{attention_forward.1} parent=5 // pred_check
        _
      $region42: #{attention_forward.1} parent=5 // pred_check_branch
        %248 = sbr.rel (%p245) target = $region44
      $region43: #{attention_forward.1} parent=5 // pred_region
        %s249 = ssub.s32 %s17, 1
        // Predicated region
        $region45: #{attention_forward.1} parent=43 // pred_check
          %p250 = pneg %p106
        $region46: #{attention_forward.1} parent=43 // pred_check_branch
          %252 = sbr.rel (%p250) target = $region48
        $region47: #{attention_forward.1} parent=43 // pred_region
          %253 = dma.done [#allocation3], 3072
        $region48: #{attention_forward.1} parent=43 // pred_fallthru
          _
        // Predicated region
        $region49: #{attention_forward.1} parent=43 // pred_check
          %p254 = pneg %p127
        $region50: #{attention_forward.1} parent=43 // pred_check_branch
          %256 = sbr.rel (%p254) target = $region52
        $region51: #{attention_forward.1} parent=43 // pred_region
          %257 = dma.done [#allocation6], 1024
        $region52: #{attention_forward.1} parent=43 // pred_fallthru
          _
        // Predicated region
        $region53: #{attention_forward.1} parent=43 // pred_check
          %p258 = pneg %p148
        $region54: #{attention_forward.1} parent=43 // pred_check_branch
          %260 = sbr.rel (%p258) target = $region56
        $region55: #{attention_forward.1} parent=43 // pred_region
          %261 = dma.done [#allocation6], 16
        $region56: #{attention_forward.1} parent=43 // pred_fallthru
          _
        %p262 = scmp.lt.s32.totalorder %s22, 1
        %s263 = scalar_select %p262, %s22, 1
        %s264 = smul.addr %s263, 8
        %s265 = scalar_lea.vmem %s0, %s264
        %p266 = pneg %p43
        %p267 = pneg %p40
        %p268 = pneg %p64
        %p269 = pneg %p61
        %p270 = pneg %p85
        %p271 = pneg %p82
        %p272 = pneg %p106
        %p273 = pneg %p103
        %p274 = pneg %p127
        %p275 = pneg %p124
        %p276 = pneg %p148
        %p277 = pneg %p145
        %p278 = pneg %p174
        %p279 = pneg %p171
        %s280 = sand.u32 %s161, 1
        %s281 = scalar_lea.sflag [#allocation4], %s280
        %s282 = sand.u32 %s161, 1
        %s283 = smul.addr %s282, 8
        %s284 = scalar_lea.vmem [#allocation8], %s283
        %p285 = scmp.lt.s32.totalorder %s22, 1
        %s286 = scalar_select %p285, %s22, 1
        %s287 = smul.addr %s286, 8
        %s288 = scalar_lea.vmem %s0, %s287
        %v290 = vld [vmem:[%s288] sm:$0xff]
        %v291 = vld [vmem:[%s1] sm:$0x1]
        %v292 = vld [vmem:[%s2] sm:$0x1]
        %293 = vadd.xlane.f32.xlu0 %v290
        %v294 = vpop.xlane.xlu0 %293
        %v295 = vrcp.pop 128.0
        %v296 = vmul.f32 %v294, %v295
        %v297 = vsub.f32 %v290, %v296
        %v298 = vmul.f32 %v297, %v297
        %299 = vadd.xlane.f32.xlu0 %v298
        %v300 = vpop.xlane.xlu0 %299
        %v301 = vmul.f32 %v300, %v295
        %v302 = vadd.f32 %v301, 1e-05
        %v303 = vrsqrt.pop %v302
        %v304 = vmul.f32 %v297, %v303
        %v306 = vlaneseq
        %v307 = vshrl.u32 %v306, 7
        %v308 = vsub.s32 0, %v307
        %v309 = vrot.slane %v291, %v308
        %v311 = vmul.f32 %v304, %v309
        %v313 = vlaneseq
        %v314 = vshrl.u32 %v313, 7
        %v315 = vsub.s32 0, %v314
        %v316 = vrot.slane %v292, %v315
        %v318 = vadd.f32 %v311, %v316
        %v319 = vpack.c.bf16 %v318, %v318
        %v320 = vld [vmem:[#allocation2] sm:$0xff]
        %v321 = vld [vmem:[#allocation2 + $0x8] sm:$0xf]
        %v322 = vld [vmem:[#allocation2 + $0xc] sm:$0xff]
        %v323 = vld [vmem:[#allocation2 + $0x14] sm:$0xf]
        %v324 = vld [vmem:[#allocation2 + $0x18] sm:$0xff]
        %v325 = vld [vmem:[#allocation2 + $0x20] sm:$0xf]
        %v326 = vld [vmem:[#allocation2 + $0x24] sm:$0xff]
        %v327 = vld [vmem:[#allocation2 + $0x2c] sm:$0xf]
        %v328 = vld [vmem:[#allocation2 + $0x30] sm:$0xff]
        %v329 = vld [vmem:[#allocation2 + $0x38] sm:$0xf]
        %v330 = vld [vmem:[#allocation2 + $0x3c] sm:$0xff]
        %v331 = vld [vmem:[#allocation2 + $0x44] sm:$0xf]
        %v332 = vld [vmem:[#allocation2 + $0x48] sm:$0xff]
        %v333 = vld [vmem:[#allocation2 + $0x50] sm:$0xf]
        %v334 = vld [vmem:[#allocation2 + $0x54] sm:$0xff]
        %v335 = vld [vmem:[#allocation2 + $0x5c] sm:$0xf]
        %v336 = vld [vmem:[#allocation2 + $0x60] sm:$0xff]
        %v337 = vld [vmem:[#allocation2 + $0x68] sm:$0xf]
        %v338 = vld [vmem:[#allocation2 + $0x6c] sm:$0xff]
        %v339 = vld [vmem:[#allocation2 + $0x74] sm:$0xf]
        %v340 = vld [vmem:[#allocation2 + $0x78] sm:$0xff]
        %v341 = vld [vmem:[#allocation2 + $0x80] sm:$0xf]
        %v342 = vld [vmem:[#allocation2 + $0x84] sm:$0xff]
        %v343 = vld [vmem:[#allocation2 + $0x8c] sm:$0xf]
        %v344 = vld [vmem:[#allocation2 + $0x90] sm:$0xff]
        %v345 = vld [vmem:[#allocation2 + $0x98] sm:$0xf]
        %v346 = vld [vmem:[#allocation2 + $0x9c] sm:$0xff]
        %v347 = vld [vmem:[#allocation2 + $0xa4] sm:$0xf]
        %v348 = vld [vmem:[#allocation2 + $0xa8] sm:$0xff]
        %v349 = vld [vmem:[#allocation2 + $0xb0] sm:$0xf]
        %v350 = vld [vmem:[#allocation2 + $0xb4] sm:$0xff]
        %v351 = vld [vmem:[#allocation2 + $0xbc] sm:$0xf]
        %v384 = vunpack.c.l.b16 %v320
        %v385 = vunpack.c.h.b16 %v320
        %v386 = vunpack.c.l.b16 %v321
        %v387 = vunpack.c.l.b16 %v322
        %v388 = vunpack.c.h.b16 %v322
        %v389 = vunpack.c.l.b16 %v323
        %v390 = vunpack.c.l.b16 %v324
        %v391 = vunpack.c.h.b16 %v324
        %v392 = vunpack.c.l.b16 %v325
        %v393 = vunpack.c.l.b16 %v326
        %v394 = vunpack.c.h.b16 %v326
        %v395 = vunpack.c.l.b16 %v327
        %v396 = vunpack.c.l.b16 %v328
        %v397 = vunpack.c.h.b16 %v328
        %v398 = vunpack.c.l.b16 %v329
        %v399 = vunpack.c.l.b16 %v330
        %v400 = vunpack.c.h.b16 %v330
        %v401 = vunpack.c.l.b16 %v331
        %v402 = vunpack.c.l.b16 %v332
        %v403 = vunpack.c.h.b16 %v332
        %v404 = vunpack.c.l.b16 %v333
        %v405 = vunpack.c.l.b16 %v334
        %v406 = vunpack.c.h.b16 %v334
        %v407 = vunpack.c.l.b16 %v335
        %v408 = vunpack.c.l.b16 %v336
        %v409 = vunpack.c.h.b16 %v336
        %v410 = vunpack.c.l.b16 %v337
        %v411 = vunpack.c.l.b16 %v338
        %v412 = vunpack.c.h.b16 %v338
        %v413 = vunpack.c.l.b16 %v339
        %v414 = vunpack.c.l.b16 %v340
        %v415 = vunpack.c.h.b16 %v340
        %v416 = vunpack.c.l.b16 %v341
        %v417 = vunpack.c.l.b16 %v342
        %v418 = vunpack.c.h.b16 %v342
        %v419 = vunpack.c.l.b16 %v343
        %v420 = vunpack.c.l.b16 %v344
        %v421 = vunpack.c.h.b16 %v344
        %v422 = vunpack.c.l.b16 %v345
        %v423 = vunpack.c.l.b16 %v346
        %v424 = vunpack.c.h.b16 %v346
        %v425 = vunpack.c.l.b16 %v347
        %v426 = vunpack.c.l.b16 %v348
        %v427 = vunpack.c.h.b16 %v348
        %v428 = vunpack.c.l.b16 %v349
        %v429 = vunpack.c.l.b16 %v350
        %v430 = vunpack.c.h.b16 %v350
        %v431 = vunpack.c.l.b16 %v351
        %v432 = vpack.c.b16 %v387, %v384
        %v433 = vpack.c.b16 %v388, %v385
        %v434 = vpack.c.b16 %v389, %v386
        %v435 = vpack.c.b16 %v393, %v390
        %v436 = vpack.c.b16 %v394, %v391
        %v437 = vpack.c.b16 %v395, %v392
        %v438 = vpack.c.b16 %v399, %v396
        %v439 = vpack.c.b16 %v400, %v397
        %v440 = vpack.c.b16 %v401, %v398
        %v441 = vpack.c.b16 %v405, %v402
        %v442 = vpack.c.b16 %v406, %v403
        %v443 = vpack.c.b16 %v407, %v404
        %v444 = vpack.c.b16 %v411, %v408
        %v445 = vpack.c.b16 %v412, %v409
        %v446 = vpack.c.b16 %v413, %v410
        %v447 = vpack.c.b16 %v417, %v414
        %v448 = vpack.c.b16 %v418, %v415
        %v449 = vpack.c.b16 %v419, %v416
        %v450 = vpack.c.b16 %v423, %v420
        %v451 = vpack.c.b16 %v424, %v421
        %v452 = vpack.c.b16 %v425, %v422
        %v453 = vpack.c.b16 %v429, %v426
        %v454 = vpack.c.b16 %v430, %v427
        %v455 = vpack.c.b16 %v431, %v428
        %480 = vmatprep.subr.bf16.mxu0 %v433
        %481 = vmatpush1.bf16.msra.mxu0 %v432
        %482 = vmatprep.subr.bf16.mxu0 %v436
        %483 = vmatpush1.bf16.msra.mxu0 %v435
        %484 = vmatprep.subr.bf16.mxu0 %v439
        %485 = vmatpush1.bf16.msra.mxu0 %v438
        %486 = vmatprep.subr.bf16.mxu0 %v442
        %487 = vmatpush1.bf16.msra.mxu0 %v441
        %488 = vmatprep.subr.bf16.mxu0 %v445
        %489 = vmatpush1.bf16.msra.mxu0 %v444
        %490 = vmatprep.subr.bf16.mxu0 %v448
        %491 = vmatpush1.bf16.msra.mxu0 %v447
        %492 = vmatprep.subr.bf16.mxu0 %v451
        %493 = vmatpush1.bf16.msra.mxu0 %v450
        %494 = vmatprep.subr.bf16.mxu0 %v454
        %495 = vmatpush1.bf16.msra.mxu0 %v453
        %496 = vmatprep.subr.bf16.mxu0 0
        %497 = vmatpush1.bf16.msra.mxu0 0
        %498 = vmatprep.subr.bf16.mxu0 0
        %499 = vmatpush1.bf16.msra.mxu0 0
        %500 = vmatprep.subr.bf16.mxu0 0
        %501 = vmatpush1.bf16.msra.mxu0 0
        %502 = vmatprep.subr.bf16.mxu0 0
        %503 = vmatpush1.bf16.msra.mxu0 0
        %504 = vmatprep.subr.bf16.mxu0 0
        %505 = vmatpush1.bf16.msra.mxu0 0
        %506 = vmatprep.subr.bf16.mxu0 0
        %507 = vmatpush1.bf16.msra.mxu0 0
        %508 = vmatprep.subr.bf16.mxu0 0
        %509 = vmatpush1.bf16.msra.mxu0 0
        %510 = vmatprep.subr.bf16.mxu0 0
        %511 = vmatpush1.bf16.msra.mxu0 0
        %512 = vmatprep.mubr.bf16.mxu0 0
        %513 = vmatmul.mubr.bf16.gmra.mrb[0].mxu0 %v319
        %v514 = vpop.f32.mrb[0].mxu0
        %v515 = vadd.f32 0.0, %v514
        %v516 = vpop.f32.mrb[0].mxu0
        %v517 = vadd.f32 0.0, %v516
        %v518 = vpop.f32.mrb[0].mxu0
        %v519 = vpop.f32.mrb[0].mxu0
        %520 = vdwg.mxu0
        %521 = vmatprep.subr.bf16.mxu0 0
        %522 = vmatpush1.bf16.msra.mxu0 %v434
        %523 = vmatprep.subr.bf16.mxu0 0
        %524 = vmatpush1.bf16.msra.mxu0 %v437
        %525 = vmatprep.subr.bf16.mxu0 0
        %526 = vmatpush1.bf16.msra.mxu0 %v440
        %527 = vmatprep.subr.bf16.mxu0 0
        %528 = vmatpush1.bf16.msra.mxu0 %v443
        %529 = vmatprep.subr.bf16.mxu0 0
        %530 = vmatpush1.bf16.msra.mxu0 %v446
        %531 = vmatprep.subr.bf16.mxu0 0
        %532 = vmatpush1.bf16.msra.mxu0 %v449
        %533 = vmatprep.subr.bf16.mxu0 0
        %534 = vmatpush1.bf16.msra.mxu0 %v452
        %535 = vmatprep.subr.bf16.mxu0 0
        %536 = vmatpush1.bf16.msra.mxu0 %v455
        %537 = vmatprep.subr.bf16.mxu0 0
        %538 = vmatpush1.bf16.msra.mxu0 0
        %539 = vmatprep.subr.bf16.mxu0 0
        %540 = vmatpush1.bf16.msra.mxu0 0
        %541 = vmatprep.subr.bf16.mxu0 0
        %542 = vmatpush1.bf16.msra.mxu0 0
        %543 = vmatprep.subr.bf16.mxu0 0
        %544 = vmatpush1.bf16.msra.mxu0 0
        %545 = vmatprep.subr.bf16.mxu0 0
        %546 = vmatpush1.bf16.msra.mxu0 0
        %547 = vmatprep.subr.bf16.mxu0 0
        %548 = vmatpush1.bf16.msra.mxu0 0
        %549 = vmatprep.subr.bf16.mxu0 0
        %550 = vmatpush1.bf16.msra.mxu0 0
        %551 = vmatprep.subr.bf16.mxu0 0
        %552 = vmatpush1.bf16.msra.mxu0 0
        %553 = vmatprep.mubr.bf16.mxu0 0
        %554 = vmatmul.mubr.bf16.gmra.mrb[0].mxu0 %v319
        %v555 = vpop.f32.mrb[0].mxu0
        %v556 = vadd.f32 0.0, %v555
        %v557 = vpop.f32.mrb[0].mxu0
        %v558 = vpop.f32.mrb[0].mxu0
        %v559 = vpop.f32.mrb[0].mxu0
        %560 = vdwg.mxu0
        %v561 = vpack.c.bf16 %v515, %v515
        %v562 = vpack.c.bf16 %v517, %v517
        %v563 = vpack.c.bf16 %v556, %v556
        %565 = vrot.lane.b32.xlu0 %v561, 96
        %v566 = vpop.permute.xlu0 %565
        %567 = vrot.lane.b32.xlu0 %v561, 64
        %v568 = vpop.permute.xlu0 %567
        %569 = vrot.lane.b32.xlu0 %v561, 32
        %v570 = vpop.permute.xlu0 %569
        %v572 = vunpack.c.l.s4 1983009808
        %v573 = vunpack.c.0.s8 %v572
        %v574 = vlaneseq
        %v575 = vshrl.u32 %v574, 7
        %v576 = vsub.s32 %v573, %v575
        %v577 = vrot.slane %v561, %v576
        %v580 = vunpack.c.l.s4 1983009808
        %v581 = vunpack.c.0.s8 %v580
        %v582 = vlaneseq
        %v583 = vshrl.u32 %v582, 7
        %v584 = vsub.s32 %v581, %v583
        %v585 = vrot.slane %v568, %v584
        %v586 = vcombine.low %v577, %v585
        %v587 = vcombine.high %v577, %v585
        %v589 = vunpack.c.l.s4 1934713408
        %v590 = vunpack.c.0.s8 %v589
        %v591 = vlaneseq
        %v592 = vshrl.u32 %v591, 7
        %v593 = vsub.s32 %v590, %v592
        %v594 = vrot.slane %v586, %v593
        %v596 = vunpack.c.l.s4 1934713408
        %v597 = vunpack.c.0.s8 %v596
        %v598 = vlaneseq
        %v599 = vshrl.u32 %v598, 7
        %v600 = vsub.s32 %v597, %v599
        %v601 = vrot.slane %v587, %v600
        %v602 = vcombine.high %v594, 0
        %v603 = vcombine.high %v601, 0
        %v606 = vunpack.c.l.s4 1983009808
        %v607 = vunpack.c.0.s8 %v606
        %v608 = vlaneseq
        %v609 = vshrl.u32 %v608, 7
        %v610 = vsub.s32 %v607, %v609
        %v611 = vrot.slane %v566, %v610
        %v614 = vunpack.c.l.s4 1983009808
        %v615 = vunpack.c.0.s8 %v614
        %v616 = vlaneseq
        %v617 = vshrl.u32 %v616, 7
        %v618 = vsub.s32 %v615, %v617
        %v619 = vrot.slane %v570, %v618
        %v620 = vcombine.low %v611, %v619
        %v621 = vcombine.high %v611, %v619
        %v623 = vunpack.c.l.s4 1934713408
        %v624 = vunpack.c.0.s8 %v623
        %v625 = vlaneseq
        %v626 = vshrl.u32 %v625, 7
        %v627 = vsub.s32 %v624, %v626
        %v628 = vrot.slane %v620, %v627
        %v630 = vunpack.c.l.s4 1934713408
        %v631 = vunpack.c.0.s8 %v630
        %v632 = vlaneseq
        %v633 = vshrl.u32 %v632, 7
        %v634 = vsub.s32 %v631, %v633
        %v635 = vrot.slane %v621, %v634
        %v636 = vcombine.high %v628, 0
        %v637 = vcombine.high %v635, 0
        %v640 = vpack.i.b16 %v628, %v594
        %v642 = vshrl.u32 %v594, 16
        %v643 = vshrl.u32 %v628, 16
        %v644 = vpack.i.b16 %v643, %v642
        %v648 = vpack.i.b16 %v636, %v602
        %v650 = vshrl.u32 %v602, 16
        %v651 = vshrl.u32 %v636, 16
        %v652 = vpack.i.b16 %v651, %v650
        %v656 = vpack.i.b16 %v635, %v601
        %v658 = vshrl.u32 %v601, 16
        %v659 = vshrl.u32 %v635, 16
        %v660 = vpack.i.b16 %v659, %v658
        %v664 = vpack.i.b16 %v637, %v603
        %v666 = vshrl.u32 %v603, 16
        %v667 = vshrl.u32 %v637, 16
        %v668 = vpack.i.b16 %v667, %v666
        %v670 = vcombine.low %v640, %v656
        %v672 = vunpack.c.l.s4 1983009808
        %v673 = vunpack.c.0.s8 %v672
        %v674 = vlaneseq
        %v675 = vshrl.u32 %v674, 7
        %v676 = vsub.s32 %v673, %v675
        %v677 = vrot.slane %v670, %v676
        %v678 = vcombine.low %v648, %v664
        %v680 = vunpack.c.l.s4 1983009808
        %v681 = vunpack.c.0.s8 %v680
        %v682 = vlaneseq
        %v683 = vshrl.u32 %v682, 7
        %v684 = vsub.s32 %v681, %v683
        %v685 = vrot.slane %v678, %v684
        %v686 = vcombine.low %v677, %v685
        %v688 = vunpack.c.l.s4 1934713408
        %v689 = vunpack.c.0.s8 %v688
        %v690 = vlaneseq
        %v691 = vshrl.u32 %v690, 7
        %v692 = vsub.s32 %v689, %v691
        %v693 = vrot.slane %v686, %v692
        %v694 = vcombine.high %v693, 0
        %v695 = vcombine.low %v644, %v660
        %v697 = vunpack.c.l.s4 1983009808
        %v698 = vunpack.c.0.s8 %v697
        %v699 = vlaneseq
        %v700 = vshrl.u32 %v699, 7
        %v701 = vsub.s32 %v698, %v700
        %v702 = vrot.slane %v695, %v701
        %v703 = vcombine.low %v652, %v668
        %v705 = vunpack.c.l.s4 1983009808
        %v706 = vunpack.c.0.s8 %v705
        %v707 = vlaneseq
        %v708 = vshrl.u32 %v707, 7
        %v709 = vsub.s32 %v706, %v708
        %v710 = vrot.slane %v703, %v709
        %v711 = vcombine.low %v702, %v710
        %v713 = vunpack.c.l.s4 1934713408
        %v714 = vunpack.c.0.s8 %v713
        %v715 = vlaneseq
        %v716 = vshrl.u32 %v715, 7
        %v717 = vsub.s32 %v714, %v716
        %v718 = vrot.slane %v711, %v717
        %v719 = vcombine.high %v718, 0
        %v722 = vpack.i.b16 %v718, %v693
        %v723 = vshrl.u32 %v693, 16
        %v724 = vshrl.u32 %v718, 16
        %v725 = vpack.i.b16 %v724, %v723
        %v728 = vpack.i.b16 %v719, %v694
        %v729 = vshrl.u32 %v694, 16
        %v730 = vshrl.u32 %v719, 16
        %v731 = vpack.i.b16 %v730, %v729
        %733 = vrot.lane.b32.xlu0 %v562, 96
        %v734 = vpop.permute.xlu0 %733
        %735 = vrot.lane.b32.xlu0 %v562, 64
        %v736 = vpop.permute.xlu0 %735
        %737 = vrot.lane.b32.xlu0 %v562, 32
        %v738 = vpop.permute.xlu0 %737
        %v740 = vunpack.c.l.s4 1983009808
        %v741 = vunpack.c.0.s8 %v740
        %v742 = vlaneseq
        %v743 = vshrl.u32 %v742, 7
        %v744 = vsub.s32 %v741, %v743
        %v745 = vrot.slane %v562, %v744
        %v748 = vunpack.c.l.s4 1983009808
        %v749 = vunpack.c.0.s8 %v748
        %v750 = vlaneseq
        %v751 = vshrl.u32 %v750, 7
        %v752 = vsub.s32 %v749, %v751
        %v753 = vrot.slane %v736, %v752
        %v754 = vcombine.low %v745, %v753
        %v755 = vcombine.high %v745, %v753
        %v757 = vunpack.c.l.s4 1934713408
        %v758 = vunpack.c.0.s8 %v757
        %v759 = vlaneseq
        %v760 = vshrl.u32 %v759, 7
        %v761 = vsub.s32 %v758, %v760
        %v762 = vrot.slane %v754, %v761
        %v764 = vunpack.c.l.s4 1934713408
        %v765 = vunpack.c.0.s8 %v764
        %v766 = vlaneseq
        %v767 = vshrl.u32 %v766, 7
        %v768 = vsub.s32 %v765, %v767
        %v769 = vrot.slane %v755, %v768
        %v770 = vcombine.high %v762, 0
        %v771 = vcombine.high %v769, 0
        %v774 = vunpack.c.l.s4 1983009808
        %v775 = vunpack.c.0.s8 %v774
        %v776 = vlaneseq
        %v777 = vshrl.u32 %v776, 7
        %v778 = vsub.s32 %v775, %v777
        %v779 = vrot.slane %v734, %v778
        %v782 = vunpack.c.l.s4 1983009808
        %v783 = vunpack.c.0.s8 %v782
        %v784 = vlaneseq
        %v785 = vshrl.u32 %v784, 7
        %v786 = vsub.s32 %v783, %v785
        %v787 = vrot.slane %v738, %v786
        %v788 = vcombine.low %v779, %v787
        %v789 = vcombine.high %v779, %v787
        %v791 = vunpack.c.l.s4 1934713408
        %v792 = vunpack.c.0.s8 %v791
        %v793 = vlaneseq
        %v794 = vshrl.u32 %v793, 7
        %v795 = vsub.s32 %v792, %v794
        %v796 = vrot.slane %v788, %v795
        %v798 = vunpack.c.l.s4 1934713408
        %v799 = vunpack.c.0.s8 %v798
        %v800 = vlaneseq
        %v801 = vshrl.u32 %v800, 7
        %v802 = vsub.s32 %v799, %v801
        %v803 = vrot.slane %v789, %v802
        %v804 = vcombine.high %v796, 0
        %v805 = vcombine.high %v803, 0
        %v808 = vpack.i.b16 %v796, %v762
        %v810 = vshrl.u32 %v762, 16
        %v811 = vshrl.u32 %v796, 16
        %v812 = vpack.i.b16 %v811, %v810
        %v816 = vpack.i.b16 %v804, %v770
        %v818 = vshrl.u32 %v770, 16
        %v819 = vshrl.u32 %v804, 16
        %v820 = vpack.i.b16 %v819, %v818
        %v824 = vpack.i.b16 %v803, %v769
        %v826 = vshrl.u32 %v769, 16
        %v827 = vshrl.u32 %v803, 16
        %v828 = vpack.i.b16 %v827, %v826
        %v832 = vpack.i.b16 %v805, %v771
        %v834 = vshrl.u32 %v771, 16
        %v835 = vshrl.u32 %v805, 16
        %v836 = vpack.i.b16 %v835, %v834
        %v838 = vcombine.low %v808, %v824
        %v840 = vunpack.c.l.s4 1983009808
        %v841 = vunpack.c.0.s8 %v840
        %v842 = vlaneseq
        %v843 = vshrl.u32 %v842, 7
        %v844 = vsub.s32 %v841, %v843
        %v845 = vrot.slane %v838, %v844
        %v846 = vcombine.low %v816, %v832
        %v848 = vunpack.c.l.s4 1983009808
        %v849 = vunpack.c.0.s8 %v848
        %v850 = vlaneseq
        %v851 = vshrl.u32 %v850, 7
        %v852 = vsub.s32 %v849, %v851
        %v853 = vrot.slane %v846, %v852
        %v854 = vcombine.low %v845, %v853
        %v856 = vunpack.c.l.s4 1934713408
        %v857 = vunpack.c.0.s8 %v856
        %v858 = vlaneseq
        %v859 = vshrl.u32 %v858, 7
        %v860 = vsub.s32 %v857, %v859
        %v861 = vrot.slane %v854, %v860
        %v862 = vcombine.high %v861, 0
        %v863 = vcombine.low %v812, %v828
        %v865 = vunpack.c.l.s4 1983009808
        %v866 = vunpack.c.0.s8 %v865
        %v867 = vlaneseq
        %v868 = vshrl.u32 %v867, 7
        %v869 = vsub.s32 %v866, %v868
        %v870 = vrot.slane %v863, %v869
        %v871 = vcombine.low %v820, %v836
        %v873 = vunpack.c.l.s4 1983009808
        %v874 = vunpack.c.0.s8 %v873
        %v875 = vlaneseq
        %v876 = vshrl.u32 %v875, 7
        %v877 = vsub.s32 %v874, %v876
        %v878 = vrot.slane %v871, %v877
        %v879 = vcombine.low %v870, %v878
        %v881 = vunpack.c.l.s4 1934713408
        %v882 = vunpack.c.0.s8 %v881
        %v883 = vlaneseq
        %v884 = vshrl.u32 %v883, 7
        %v885 = vsub.s32 %v882, %v884
        %v886 = vrot.slane %v879, %v885
        %v887 = vcombine.high %v886, 0
        %v890 = vpack.i.b16 %v886, %v861
        %v891 = vshrl.u32 %v861, 16
        %v892 = vshrl.u32 %v886, 16
        %v893 = vpack.i.b16 %v892, %v891
        %v896 = vpack.i.b16 %v887, %v862
        %v897 = vshrl.u32 %v862, 16
        %v898 = vshrl.u32 %v887, 16
        %v899 = vpack.i.b16 %v898, %v897
        %901 = vrot.lane.b32.xlu0 %v563, 96
        %v902 = vpop.permute.xlu0 %901
        %903 = vrot.lane.b32.xlu0 %v563, 64
        %v904 = vpop.permute.xlu0 %903
        %905 = vrot.lane.b32.xlu0 %v563, 32
        %v906 = vpop.permute.xlu0 %905
        %v908 = vunpack.c.l.s4 1983009808
        %v909 = vunpack.c.0.s8 %v908
        %v910 = vlaneseq
        %v911 = vshrl.u32 %v910, 7
        %v912 = vsub.s32 %v909, %v911
        %v913 = vrot.slane %v563, %v912
        %v916 = vunpack.c.l.s4 1983009808
        %v917 = vunpack.c.0.s8 %v916
        %v918 = vlaneseq
        %v919 = vshrl.u32 %v918, 7
        %v920 = vsub.s32 %v917, %v919
        %v921 = vrot.slane %v904, %v920
        %v922 = vcombine.low %v913, %v921
        %v923 = vcombine.high %v913, %v921
        %v925 = vunpack.c.l.s4 1934713408
        %v926 = vunpack.c.0.s8 %v925
        %v927 = vlaneseq
        %v928 = vshrl.u32 %v927, 7
        %v929 = vsub.s32 %v926, %v928
        %v930 = vrot.slane %v922, %v929
        %v932 = vunpack.c.l.s4 1934713408
        %v933 = vunpack.c.0.s8 %v932
        %v934 = vlaneseq
        %v935 = vshrl.u32 %v934, 7
        %v936 = vsub.s32 %v933, %v935
        %v937 = vrot.slane %v923, %v936
        %v938 = vcombine.high %v930, 0
        %v939 = vcombine.high %v937, 0
        %v942 = vunpack.c.l.s4 1983009808
        %v943 = vunpack.c.0.s8 %v942
        %v944 = vlaneseq
        %v945 = vshrl.u32 %v944, 7
        %v946 = vsub.s32 %v943, %v945
        %v947 = vrot.slane %v902, %v946
        %v950 = vunpack.c.l.s4 1983009808
        %v951 = vunpack.c.0.s8 %v950
        %v952 = vlaneseq
        %v953 = vshrl.u32 %v952, 7
        %v954 = vsub.s32 %v951, %v953
        %v955 = vrot.slane %v906, %v954
        %v956 = vcombine.low %v947, %v955
        %v957 = vcombine.high %v947, %v955
        %v959 = vunpack.c.l.s4 1934713408
        %v960 = vunpack.c.0.s8 %v959
        %v961 = vlaneseq
        %v962 = vshrl.u32 %v961, 7
        %v963 = vsub.s32 %v960, %v962
        %v964 = vrot.slane %v956, %v963
        %v966 = vunpack.c.l.s4 1934713408
        %v967 = vunpack.c.0.s8 %v966
        %v968 = vlaneseq
        %v969 = vshrl.u32 %v968, 7
        %v970 = vsub.s32 %v967, %v969
        %v971 = vrot.slane %v957, %v970
        %v972 = vcombine.high %v964, 0
        %v973 = vcombine.high %v971, 0
        %v976 = vpack.i.b16 %v964, %v930
        %v978 = vshrl.u32 %v930, 16
        %v979 = vshrl.u32 %v964, 16
        %v980 = vpack.i.b16 %v979, %v978
        %v984 = vpack.i.b16 %v972, %v938
        %v986 = vshrl.u32 %v938, 16
        %v987 = vshrl.u32 %v972, 16
        %v988 = vpack.i.b16 %v987, %v986
        %v992 = vpack.i.b16 %v971, %v937
        %v994 = vshrl.u32 %v937, 16
        %v995 = vshrl.u32 %v971, 16
        %v996 = vpack.i.b16 %v995, %v994
        %v1000 = vpack.i.b16 %v973, %v939
        %v1002 = vshrl.u32 %v939, 16
        %v1003 = vshrl.u32 %v973, 16
        %v1004 = vpack.i.b16 %v1003, %v1002
        %v1006 = vcombine.low %v976, %v992
        %v1008 = vunpack.c.l.s4 1983009808
        %v1009 = vunpack.c.0.s8 %v1008
        %v1010 = vlaneseq
        %v1011 = vshrl.u32 %v1010, 7
        %v1012 = vsub.s32 %v1009, %v1011
        %v1013 = vrot.slane %v1006, %v1012
        %v1014 = vcombine.low %v984, %v1000
        %v1016 = vunpack.c.l.s4 1983009808
        %v1017 = vunpack.c.0.s8 %v1016
        %v1018 = vlaneseq
        %v1019 = vshrl.u32 %v1018, 7
        %v1020 = vsub.s32 %v1017, %v1019
        %v1021 = vrot.slane %v1014, %v1020
        %v1022 = vcombine.low %v1013, %v1021
        %v1024 = vunpack.c.l.s4 1934713408
        %v1025 = vunpack.c.0.s8 %v1024
        %v1026 = vlaneseq
        %v1027 = vshrl.u32 %v1026, 7
        %v1028 = vsub.s32 %v1025, %v1027
        %v1029 = vrot.slane %v1022, %v1028
        %v1030 = vcombine.high %v1029, 0
        %v1031 = vcombine.low %v980, %v996
        %v1033 = vunpack.c.l.s4 1983009808
        %v1034 = vunpack.c.0.s8 %v1033
        %v1035 = vlaneseq
        %v1036 = vshrl.u32 %v1035, 7
        %v1037 = vsub.s32 %v1034, %v1036
        %v1038 = vrot.slane %v1031, %v1037
        %v1039 = vcombine.low %v988, %v1004
        %v1041 = vunpack.c.l.s4 1983009808
        %v1042 = vunpack.c.0.s8 %v1041
        %v1043 = vlaneseq
        %v1044 = vshrl.u32 %v1043, 7
        %v1045 = vsub.s32 %v1042, %v1044
        %v1046 = vrot.slane %v1039, %v1045
        %v1047 = vcombine.low %v1038, %v1046
        %v1049 = vunpack.c.l.s4 1934713408
        %v1050 = vunpack.c.0.s8 %v1049
        %v1051 = vlaneseq
        %v1052 = vshrl.u32 %v1051, 7
        %v1053 = vsub.s32 %v1050, %v1052
        %v1054 = vrot.slane %v1047, %v1053
        %v1055 = vcombine.high %v1054, 0
        %v1058 = vpack.i.b16 %v1054, %v1029
        %v1059 = vshrl.u32 %v1029, 16
        %v1060 = vshrl.u32 %v1054, 16
        %v1061 = vpack.i.b16 %v1060, %v1059
        %v1064 = vpack.i.b16 %v1055, %v1030
        %v1065 = vshrl.u32 %v1030, 16
        %v1066 = vshrl.u32 %v1055, 16
        %v1067 = vpack.i.b16 %v1066, %v1065
        %vm1068 = vcmask 261120
        %v1070 = vsel %vm1068, %v722, 0
        %v1073 = vsel %vm1068, %v890, 0
        %1075 = vmatprep.subr.bf16.mxu0 0
        %1076 = vmatpush1.bf16.xpose.msra.mxu0 %v1073
        %1077 = vmatprep.subr.bf16.mxu0 0
        %1078 = vmatpush1.bf16.xpose.msra.mxu0 0
        %1079 = vmatprep.subr.bf16.mxu0 0
        %1080 = vmatpush1.bf16.xpose.msra.mxu0 0
        %1081 = vmatprep.subr.bf16.mxu0 0
        %1082 = vmatpush1.bf16.xpose.msra.mxu0 0
        %1083 = vmatprep.subr.bf16.mxu0 0
        %1084 = vmatpush1.bf16.xpose.msra.mxu0 0
        %1085 = vmatprep.subr.bf16.mxu0 0
        %1086 = vmatpush1.bf16.xpose.msra.mxu0 0
        %1087 = vmatprep.subr.bf16.mxu0 0
        %1088 = vmatpush1.bf16.xpose.msra.mxu0 0
        %1089 = vmatprep.subr.bf16.mxu0 0
        %1090 = vmatpush1.bf16.xpose.msra.mxu0 0
        %1091 = vmatprep.subr.bf16.mxu0 0
        %1092 = vmatpush1.bf16.xpose.msra.mxu0 0
        %1093 = vmatprep.subr.bf16.mxu0 0
        %1094 = vmatpush1.bf16.xpose.msra.mxu0 0
        %1095 = vmatprep.subr.bf16.mxu0 0
        %1096 = vmatpush1.bf16.xpose.msra.mxu0 0
        %1097 = vmatprep.subr.bf16.mxu0 0
        %1098 = vmatpush1.bf16.xpose.msra.mxu0 0
        %1099 = vmatprep.subr.bf16.mxu0 0
        %1100 = vmatpush1.bf16.xpose.msra.mxu0 0
        %1101 = vmatprep.subr.bf16.mxu0 0
        %1102 = vmatpush1.bf16.xpose.msra.mxu0 0
        %1103 = vmatprep.subr.bf16.mxu0 0
        %1104 = vmatpush1.bf16.xpose.msra.mxu0 0
        %1105 = vmatprep.subr.bf16.mxu0 0
        %1106 = vmatpush1.bf16.xpose.msra.mxu0 0
        %1107 = vmatprep.mubr.bf16.mxu0 0
        %1108 = vmatmul.mubr.bf16.gmra.mrb[0].mxu0 %v1070
        %v1109 = vpop.f32.mrb[0].mxu0
        %v1110 = vadd.f32 0.0, %v1109
        %v1111 = vpop.f32.mrb[0].mxu0
        %v1112 = vpop.f32.mrb[0].mxu0
        %v1113 = vpop.f32.mrb[0].mxu0
        %1114 = vdwg.mxu0
        %v1116 = vsel %vm1068, %v725, 0
        %v1119 = vsel %vm1068, %v893, 0
        %1121 = vmatprep.subr.bf16.mxu0 0
        %1122 = vmatpush1.bf16.xpose.msra.mxu0 %v1119
        %1123 = vmatprep.subr.bf16.mxu0 0
        %1124 = vmatpush1.bf16.xpose.msra.mxu0 0
        %1125 = vmatprep.subr.bf16.mxu0 0
        %1126 = vmatpush1.bf16.xpose.msra.mxu0 0
        %1127 = vmatprep.subr.bf16.mxu0 0
        %1128 = vmatpush1.bf16.xpose.msra.mxu0 0
        %1129 = vmatprep.subr.bf16.mxu0 0
        %1130 = vmatpush1.bf16.xpose.msra.mxu0 0
        %1131 = vmatprep.subr.bf16.mxu0 0
        %1132 = vmatpush1.bf16.xpose.msra.mxu0 0
        %1133 = vmatprep.subr.bf16.mxu0 0
        %1134 = vmatpush1.bf16.xpose.msra.mxu0 0
        %1135 = vmatprep.subr.bf16.mxu0 0
        %1136 = vmatpush1.bf16.xpose.msra.mxu0 0
        %1137 = vmatprep.subr.bf16.mxu0 0
        %1138 = vmatpush1.bf16.xpose.msra.mxu0 0
        %1139 = vmatprep.subr.bf16.mxu0 0
        %1140 = vmatpush1.bf16.xpose.msra.mxu0 0
        %1141 = vmatprep.subr.bf16.mxu0 0
        %1142 = vmatpush1.bf16.xpose.msra.mxu0 0
        %1143 = vmatprep.subr.bf16.mxu0 0
        %1144 = vmatpush1.bf16.xpose.msra.mxu0 0
        %1145 = vmatprep.subr.bf16.mxu0 0
        %1146 = vmatpush1.bf16.xpose.msra.mxu0 0
        %1147 = vmatprep.subr.bf16.mxu0 0
        %1148 = vmatpush1.bf16.xpose.msra.mxu0 0
        %1149 = vmatprep.subr.bf16.mxu0 0
        %1150 = vmatpush1.bf16.xpose.msra.mxu0 0
        %1151 = vmatprep.subr.bf16.mxu0 0
        %1152 = vmatpush1.bf16.xpose.msra.mxu0 0
        %1153 = vmatprep.mubr.bf16.mxu0 0
        %1154 = vmatmul.mubr.bf16.gmra.mrb[0].mxu0 %v1116
        %v1155 = vpop.f32.mrb[0].mxu0
        %v1156 = vadd.f32 0.0, %v1155
        %v1157 = vpop.f32.mrb[0].mxu0
        %v1158 = vpop.f32.mrb[0].mxu0
        %v1159 = vpop.f32.mrb[0].mxu0
        %1160 = vdwg.mxu0
        %v1162 = vsel %vm1068, %v728, 0
        %v1165 = vsel %vm1068, %v896, 0
        %1167 = vmatprep.subr.bf16.mxu0 0
        %1168 = vmatpush1.bf16.xpose.msra.mxu0 %v1165
        %1169 = vmatprep.subr.bf16.mxu0 0
        %1170 = vmatpush1.bf16.xpose.msra.mxu0 0
        %1171 = vmatprep.subr.bf16.mxu0 0
        %1172 = vmatpush1.bf16.xpose.msra.mxu0 0
        %1173 = vmatprep.subr.bf16.mxu0 0
        %1174 = vmatpush1.bf16.xpose.msra.mxu0 0
        %1175 = vmatprep.subr.bf16.mxu0 0
        %1176 = vmatpush1.bf16.xpose.msra.mxu0 0
        %1177 = vmatprep.subr.bf16.mxu0 0
        %1178 = vmatpush1.bf16.xpose.msra.mxu0 0
        %1179 = vmatprep.subr.bf16.mxu0 0
        %1180 = vmatpush1.bf16.xpose.msra.mxu0 0
        %1181 = vmatprep.subr.bf16.mxu0 0
        %1182 = vmatpush1.bf16.xpose.msra.mxu0 0
        %1183 = vmatprep.subr.bf16.mxu0 0
        %1184 = vmatpush1.bf16.xpose.msra.mxu0 0
        %1185 = vmatprep.subr.bf16.mxu0 0
        %1186 = vmatpush1.bf16.xpose.msra.mxu0 0
        %1187 = vmatprep.subr.bf16.mxu0 0
        %1188 = vmatpush1.bf16.xpose.msra.mxu0 0
        %1189 = vmatprep.subr.bf16.mxu0 0
        %1190 = vmatpush1.bf16.xpose.msra.mxu0 0
        %1191 = vmatprep.subr.bf16.mxu0 0
        %1192 = vmatpush1.bf16.xpose.msra.mxu0 0
        %1193 = vmatprep.subr.bf16.mxu0 0
        %1194 = vmatpush1.bf16.xpose.msra.mxu0 0
        %1195 = vmatprep.subr.bf16.mxu0 0
        %1196 = vmatpush1.bf16.xpose.msra.mxu0 0
        %1197 = vmatprep.subr.bf16.mxu0 0
        %1198 = vmatpush1.bf16.xpose.msra.mxu0 0
        %1199 = vmatprep.mubr.bf16.mxu0 0
        %1200 = vmatmul.mubr.bf16.gmra.mrb[0].mxu0 %v1162
        %v1201 = vpop.f32.mrb[0].mxu0
        %v1202 = vadd.f32 0.0, %v1201
        %v1203 = vpop.f32.mrb[0].mxu0
        %v1204 = vpop.f32.mrb[0].mxu0
        %v1205 = vpop.f32.mrb[0].mxu0
        %1206 = vdwg.mxu0
        %v1208 = vsel %vm1068, %v731, 0
        %v1211 = vsel %vm1068, %v899, 0
        %1213 = vmatprep.subr.bf16.mxu0 0
        %1214 = vmatpush1.bf16.xpose.msra.mxu0 %v1211
        %1215 = vmatprep.subr.bf16.mxu0 0
        %1216 = vmatpush1.bf16.xpose.msra.mxu0 0
        %1217 = vmatprep.subr.bf16.mxu0 0
        %1218 = vmatpush1.bf16.xpose.msra.mxu0 0
        %1219 = vmatprep.subr.bf16.mxu0 0
        %1220 = vmatpush1.bf16.xpose.msra.mxu0 0
        %1221 = vmatprep.subr.bf16.mxu0 0
        %1222 = vmatpush1.bf16.xpose.msra.mxu0 0
        %1223 = vmatprep.subr.bf16.mxu0 0
        %1224 = vmatpush1.bf16.xpose.msra.mxu0 0
        %1225 = vmatprep.subr.bf16.mxu0 0
        %1226 = vmatpush1.bf16.xpose.msra.mxu0 0
        %1227 = vmatprep.subr.bf16.mxu0 0
        %1228 = vmatpush1.bf16.xpose.msra.mxu0 0
        %1229 = vmatprep.subr.bf16.mxu0 0
        %1230 = vmatpush1.bf16.xpose.msra.mxu0 0
        %1231 = vmatprep.subr.bf16.mxu0 0
        %1232 = vmatpush1.bf16.xpose.msra.mxu0 0
        %1233 = vmatprep.subr.bf16.mxu0 0
        %1234 = vmatpush1.bf16.xpose.msra.mxu0 0
        %1235 = vmatprep.subr.bf16.mxu0 0
        %1236 = vmatpush1.bf16.xpose.msra.mxu0 0
        %1237 = vmatprep.subr.bf16.mxu0 0
        %1238 = vmatpush1.bf16.xpose.msra.mxu0 0
        %1239 = vmatprep.subr.bf16.mxu0 0
        %1240 = vmatpush1.bf16.xpose.msra.mxu0 0
        %1241 = vmatprep.subr.bf16.mxu0 0
        %1242 = vmatpush1.bf16.xpose.msra.mxu0 0
        %1243 = vmatprep.subr.bf16.mxu0 0
        %1244 = vmatpush1.bf16.xpose.msra.mxu0 0
        %1245 = vmatprep.mubr.bf16.mxu0 0
        %1246 = vmatmul.mubr.bf16.gmra.mrb[0].mxu0 %v1208
        %v1247 = vpop.f32.mrb[0].mxu0
        %v1248 = vadd.f32 0.0, %v1247
        %v1249 = vpop.f32.mrb[0].mxu0
        %v1250 = vpop.f32.mrb[0].mxu0
        %v1251 = vpop.f32.mrb[0].mxu0
        %1252 = vdwg.mxu0
        %vm1253 = vcmask 64512
        %v1254 = vsel %vm1253, %v1110, -inf
        %1255 = vmax.xlane.f32.xlu0 %v1254
        %v1256 = vpop.xlane.xlu0 %1255
        %v1257 = vsel %vm1253, %v1156, -inf
        %1258 = vmax.xlane.f32.xlu0 %v1257
        %v1259 = vpop.xlane.xlu0 %1258
        %v1260 = vsel %vm1253, %v1202, -inf
        %1261 = vmax.xlane.f32.xlu0 %v1260
        %v1262 = vpop.xlane.xlu0 %1261
        %v1263 = vsel %vm1253, %v1248, -inf
        %1264 = vmax.xlane.f32.xlu0 %v1263
        %v1265 = vpop.xlane.xlu0 %1264
        %v1266 = vsub.f32 %v1110, %v1256
        %v1267 = vsub.f32 %v1156, %v1259
        %v1268 = vsub.f32 %v1202, %v1262
        %v1269 = vsub.f32 %v1248, %v1265
        %v1270 = vmul.f32 %v1266, 1.442695
        %v1271 = vpow.pop %v1270
        %v1272 = vmul.f32 %v1267, 1.442695
        %v1273 = vpow.pop %v1272
        %v1274 = vmul.f32 %v1268, 1.442695
        %v1275 = vpow.pop %v1274
        %v1276 = vmul.f32 %v1269, 1.442695
        %v1277 = vpow.pop %v1276
        %v1278 = vsel %vm1253, %v1271, 0.0
        %1279 = vadd.xlane.f32.xlu0 %v1278
        %v1280 = vpop.xlane.xlu0 %1279
        %v1281 = vsel %vm1253, %v1273, 0.0
        %1282 = vadd.xlane.f32.xlu0 %v1281
        %v1283 = vpop.xlane.xlu0 %1282
        %v1284 = vsel %vm1253, %v1275, 0.0
        %1285 = vadd.xlane.f32.xlu0 %v1284
        %v1286 = vpop.xlane.xlu0 %1285
        %v1287 = vsel %vm1253, %v1277, 0.0
        %1288 = vadd.xlane.f32.xlu0 %v1287
        %v1289 = vpop.xlane.xlu0 %1288
        %v1290 = vrcp.pop %v1280
        %v1291 = vrcp.pop %v1283
        %v1292 = vrcp.pop %v1286
        %v1293 = vrcp.pop %v1289
        %v1294 = vmul.f32 %v1271, %v1290
        %v1295 = vmul.f32 %v1273, %v1291
        %v1296 = vmul.f32 %v1275, %v1292
        %v1297 = vmul.f32 %v1277, %v1293
        %v1298 = vpack.c.bf16 %v1294, %v1294
        %v1299 = vpack.c.bf16 %v1295, %v1295
        %v1300 = vpack.c.bf16 %v1296, %v1296
        %v1301 = vpack.c.bf16 %v1297, %v1297
        %v1303 = vsel %vm1253, %v1298, 0
        %vm1305 = vcmask 1043456
        %v1307 = vsel %vm1305, %v1058, 0
        %1309 = vmatprep.subr.bf16.mxu0 0
        %1310 = vmatpush1.bf16.msra.mxu0 %v1307
        %1311 = vmatprep.subr.bf16.mxu0 0
        %1312 = vmatpush1.bf16.msra.mxu0 0
        %1313 = vmatprep.subr.bf16.mxu0 0
        %1314 = vmatpush1.bf16.msra.mxu0 0
        %1315 = vmatprep.subr.bf16.mxu0 0
        %1316 = vmatpush1.bf16.msra.mxu0 0
        %1317 = vmatprep.subr.bf16.mxu0 0
        %1318 = vmatpush1.bf16.msra.mxu0 0
        %1319 = vmatprep.subr.bf16.mxu0 0
        %1320 = vmatpush1.bf16.msra.mxu0 0
        %1321 = vmatprep.subr.bf16.mxu0 0
        %1322 = vmatpush1.bf16.msra.mxu0 0
        %1323 = vmatprep.subr.bf16.mxu0 0
        %1324 = vmatpush1.bf16.msra.mxu0 0
        %1325 = vmatprep.subr.bf16.mxu0 0
        %1326 = vmatpush1.bf16.msra.mxu0 0
        %1327 = vmatprep.subr.bf16.mxu0 0
        %1328 = vmatpush1.bf16.msra.mxu0 0
        %1329 = vmatprep.subr.bf16.mxu0 0
        %1330 = vmatpush1.bf16.msra.mxu0 0
        %1331 = vmatprep.subr.bf16.mxu0 0
        %1332 = vmatpush1.bf16.msra.mxu0 0
        %1333 = vmatprep.subr.bf16.mxu0 0
        %1334 = vmatpush1.bf16.msra.mxu0 0
        %1335 = vmatprep.subr.bf16.mxu0 0
        %1336 = vmatpush1.bf16.msra.mxu0 0
        %1337 = vmatprep.subr.bf16.mxu0 0
        %1338 = vmatpush1.bf16.msra.mxu0 0
        %1339 = vmatprep.subr.bf16.mxu0 0
        %1340 = vmatpush1.bf16.msra.mxu0 0
        %1341 = vmatprep.mubr.bf16.mxu0 0
        %1342 = vmatmul.mubr.bf16.gmra.mrb[0].mxu0 %v1303
        %v1343 = vpop.f32.mrb[0].mxu0
        %v1344 = vadd.f32 0.0, %v1343
        %v1345 = vpop.f32.mrb[0].mxu0
        %v1346 = vpop.f32.mrb[0].mxu0
        %v1347 = vpop.f32.mrb[0].mxu0
        %1348 = vdwg.mxu0
        %v1350 = vsel %vm1253, %v1299, 0
        %v1353 = vsel %vm1305, %v1061, 0
        %1355 = vmatprep.subr.bf16.mxu0 0
        %1356 = vmatpush1.bf16.msra.mxu0 %v1353
        %1357 = vmatprep.subr.bf16.mxu0 0
        %1358 = vmatpush1.bf16.msra.mxu0 0
        %1359 = vmatprep.subr.bf16.mxu0 0
        %1360 = vmatpush1.bf16.msra.mxu0 0
        %1361 = vmatprep.subr.bf16.mxu0 0
        %1362 = vmatpush1.bf16.msra.mxu0 0
        %1363 = vmatprep.subr.bf16.mxu0 0
        %1364 = vmatpush1.bf16.msra.mxu0 0
        %1365 = vmatprep.subr.bf16.mxu0 0
        %1366 = vmatpush1.bf16.msra.mxu0 0
        %1367 = vmatprep.subr.bf16.mxu0 0
        %1368 = vmatpush1.bf16.msra.mxu0 0
        %1369 = vmatprep.subr.bf16.mxu0 0
        %1370 = vmatpush1.bf16.msra.mxu0 0
        %1371 = vmatprep.subr.bf16.mxu0 0
        %1372 = vmatpush1.bf16.msra.mxu0 0
        %1373 = vmatprep.subr.bf16.mxu0 0
        %1374 = vmatpush1.bf16.msra.mxu0 0
        %1375 = vmatprep.subr.bf16.mxu0 0
        %1376 = vmatpush1.bf16.msra.mxu0 0
        %1377 = vmatprep.subr.bf16.mxu0 0
        %1378 = vmatpush1.bf16.msra.mxu0 0
        %1379 = vmatprep.subr.bf16.mxu0 0
        %1380 = vmatpush1.bf16.msra.mxu0 0
        %1381 = vmatprep.subr.bf16.mxu0 0
        %1382 = vmatpush1.bf16.msra.mxu0 0
        %1383 = vmatprep.subr.bf16.mxu0 0
        %1384 = vmatpush1.bf16.msra.mxu0 0
        %1385 = vmatprep.subr.bf16.mxu0 0
        %1386 = vmatpush1.bf16.msra.mxu0 0
        %1387 = vmatprep.mubr.bf16.mxu0 0
        %1388 = vmatmul.mubr.bf16.gmra.mrb[0].mxu0 %v1350
        %v1389 = vpop.f32.mrb[0].mxu0
        %v1390 = vadd.f32 0.0, %v1389
        %v1391 = vpop.f32.mrb[0].mxu0
        %v1392 = vpop.f32.mrb[0].mxu0
        %v1393 = vpop.f32.mrb[0].mxu0
        %1394 = vdwg.mxu0
        %v1396 = vsel %vm1253, %v1300, 0
        %v1399 = vsel %vm1305, %v1064, 0
        %1401 = vmatprep.subr.bf16.mxu0 0
        %1402 = vmatpush1.bf16.msra.mxu0 %v1399
        %1403 = vmatprep.subr.bf16.mxu0 0
        %1404 = vmatpush1.bf16.msra.mxu0 0
        %1405 = vmatprep.subr.bf16.mxu0 0
        %1406 = vmatpush1.bf16.msra.mxu0 0
        %1407 = vmatprep.subr.bf16.mxu0 0
        %1408 = vmatpush1.bf16.msra.mxu0 0
        %1409 = vmatprep.subr.bf16.mxu0 0
        %1410 = vmatpush1.bf16.msra.mxu0 0
        %1411 = vmatprep.subr.bf16.mxu0 0
        %1412 = vmatpush1.bf16.msra.mxu0 0
        %1413 = vmatprep.subr.bf16.mxu0 0
        %1414 = vmatpush1.bf16.msra.mxu0 0
        %1415 = vmatprep.subr.bf16.mxu0 0
        %1416 = vmatpush1.bf16.msra.mxu0 0
        %1417 = vmatprep.subr.bf16.mxu0 0
        %1418 = vmatpush1.bf16.msra.mxu0 0
        %1419 = vmatprep.subr.bf16.mxu0 0
        %1420 = vmatpush1.bf16.msra.mxu0 0
        %1421 = vmatprep.subr.bf16.mxu0 0
        %1422 = vmatpush1.bf16.msra.mxu0 0
        %1423 = vmatprep.subr.bf16.mxu0 0
        %1424 = vmatpush1.bf16.msra.mxu0 0
        %1425 = vmatprep.subr.bf16.mxu0 0
        %1426 = vmatpush1.bf16.msra.mxu0 0
        %1427 = vmatprep.subr.bf16.mxu0 0
        %1428 = vmatpush1.bf16.msra.mxu0 0
        %1429 = vmatprep.subr.bf16.mxu0 0
        %1430 = vmatpush1.bf16.msra.mxu0 0
        %1431 = vmatprep.subr.bf16.mxu0 0
        %1432 = vmatpush1.bf16.msra.mxu0 0
        %1433 = vmatprep.mubr.bf16.mxu0 0
        %1434 = vmatmul.mubr.bf16.gmra.mrb[0].mxu0 %v1396
        %v1435 = vpop.f32.mrb[0].mxu0
        %v1436 = vadd.f32 0.0, %v1435
        %v1437 = vpop.f32.mrb[0].mxu0
        %v1438 = vpop.f32.mrb[0].mxu0
        %v1439 = vpop.f32.mrb[0].mxu0
        %1440 = vdwg.mxu0
        %v1442 = vsel %vm1253, %v1301, 0
        %v1445 = vsel %vm1305, %v1067, 0
        %1447 = vmatprep.subr.bf16.mxu0 0
        %1448 = vmatpush1.bf16.msra.mxu0 %v1445
        %1449 = vmatprep.subr.bf16.mxu0 0
        %1450 = vmatpush1.bf16.msra.mxu0 0
        %1451 = vmatprep.subr.bf16.mxu0 0
        %1452 = vmatpush1.bf16.msra.mxu0 0
        %1453 = vmatprep.subr.bf16.mxu0 0
        %1454 = vmatpush1.bf16.msra.mxu0 0
        %1455 = vmatprep.subr.bf16.mxu0 0
        %1456 = vmatpush1.bf16.msra.mxu0 0
        %1457 = vmatprep.subr.bf16.mxu0 0
        %1458 = vmatpush1.bf16.msra.mxu0 0
        %1459 = vmatprep.subr.bf16.mxu0 0
        %1460 = vmatpush1.bf16.msra.mxu0 0
        %1461 = vmatprep.subr.bf16.mxu0 0
        %1462 = vmatpush1.bf16.msra.mxu0 0
        %1463 = vmatprep.subr.bf16.mxu0 0
        %1464 = vmatpush1.bf16.msra.mxu0 0
        %1465 = vmatprep.subr.bf16.mxu0 0
        %1466 = vmatpush1.bf16.msra.mxu0 0
        %1467 = vmatprep.subr.bf16.mxu0 0
        %1468 = vmatpush1.bf16.msra.mxu0 0
        %1469 = vmatprep.subr.bf16.mxu0 0
        %1470 = vmatpush1.bf16.msra.mxu0 0
        %1471 = vmatprep.subr.bf16.mxu0 0
        %1472 = vmatpush1.bf16.msra.mxu0 0
        %1473 = vmatprep.subr.bf16.mxu0 0
        %1474 = vmatpush1.bf16.msra.mxu0 0
        %1475 = vmatprep.subr.bf16.mxu0 0
        %1476 = vmatpush1.bf16.msra.mxu0 0
        %1477 = vmatprep.subr.bf16.mxu0 0
        %1478 = vmatpush1.bf16.msra.mxu0 0
        %1479 = vmatprep.mubr.bf16.mxu0 0
        %1480 = vmatmul.mubr.bf16.gmra.mrb[0].mxu0 %v1442
        %v1481 = vpop.f32.mrb[0].mxu0
        %v1482 = vadd.f32 0.0, %v1481
        %v1483 = vpop.f32.mrb[0].mxu0
        %v1484 = vpop.f32.mrb[0].mxu0
        %v1485 = vpop.f32.mrb[0].mxu0
        %1486 = vdwg.mxu0
        %v1487 = vcombine.low %v1344, %v1436
        %v1488 = vcombine.high %v1344, %v1436
        %v1490 = vunpack.c.l.s4 1983009808
        %v1491 = vunpack.c.0.s8 %v1490
        %v1492 = vlaneseq
        %v1493 = vshrl.u32 %v1492, 7
        %v1494 = vsub.s32 %v1491, %v1493
        %v1495 = vrot.slane %v1487, %v1494
        %v1497 = vunpack.c.l.s4 1983009808
        %v1498 = vunpack.c.0.s8 %v1497
        %v1499 = vlaneseq
        %v1500 = vshrl.u32 %v1499, 7
        %v1501 = vsub.s32 %v1498, %v1500
        %v1502 = vrot.slane %v1488, %v1501
        %v1503 = vcombine.low %v1390, %v1482
        %v1504 = vcombine.high %v1390, %v1482
        %v1506 = vunpack.c.l.s4 1983009808
        %v1507 = vunpack.c.0.s8 %v1506
        %v1508 = vlaneseq
        %v1509 = vshrl.u32 %v1508, 7
        %v1510 = vsub.s32 %v1507, %v1509
        %v1511 = vrot.slane %v1503, %v1510
        %v1513 = vunpack.c.l.s4 1983009808
        %v1514 = vunpack.c.0.s8 %v1513
        %v1515 = vlaneseq
        %v1516 = vshrl.u32 %v1515, 7
        %v1517 = vsub.s32 %v1514, %v1516
        %v1518 = vrot.slane %v1504, %v1517
        %v1519 = vcombine.low %v1495, %v1511
        %v1520 = vcombine.high %v1495, %v1511
        %v1522 = vunpack.c.l.s4 1934713408
        %v1523 = vunpack.c.0.s8 %v1522
        %v1524 = vlaneseq
        %v1525 = vshrl.u32 %v1524, 7
        %v1526 = vsub.s32 %v1523, %v1525
        %v1527 = vrot.slane %v1519, %v1526
        %v1529 = vunpack.c.l.s4 1934713408
        %v1530 = vunpack.c.0.s8 %v1529
        %v1531 = vlaneseq
        %v1532 = vshrl.u32 %v1531, 7
        %v1533 = vsub.s32 %v1530, %v1532
        %v1534 = vrot.slane %v1520, %v1533
        %v1535 = vcombine.low %v1502, %v1518
        %v1536 = vcombine.high %v1502, %v1518
        %v1538 = vunpack.c.l.s4 1934713408
        %v1539 = vunpack.c.0.s8 %v1538
        %v1540 = vlaneseq
        %v1541 = vshrl.u32 %v1540, 7
        %v1542 = vsub.s32 %v1539, %v1541
        %v1543 = vrot.slane %v1535, %v1542
        %v1545 = vunpack.c.l.s4 1934713408
        %v1546 = vunpack.c.0.s8 %v1545
        %v1547 = vlaneseq
        %v1548 = vshrl.u32 %v1547, 7
        %v1549 = vsub.s32 %v1546, %v1548
        %v1550 = vrot.slane %v1536, %v1549
        %v1551 = vcombine.high %v1527, 0.0
        %v1552 = vcombine.high %v1534, 0.0
        %v1553 = vcombine.high %v1543, 0.0
        %v1554 = vcombine.high %v1550, 0.0
        %v1555 = vcombine.low %v1527, %v1534
        %v1557 = vunpack.c.l.s4 1983009808
        %v1558 = vunpack.c.0.s8 %v1557
        %v1559 = vlaneseq
        %v1560 = vshrl.u32 %v1559, 7
        %v1561 = vsub.s32 %v1558, %v1560
        %v1562 = vrot.slane %v1555, %v1561
        %v1563 = vcombine.low %v1551, %v1552
        %v1565 = vunpack.c.l.s4 1983009808
        %v1566 = vunpack.c.0.s8 %v1565
        %v1567 = vlaneseq
        %v1568 = vshrl.u32 %v1567, 7
        %v1569 = vsub.s32 %v1566, %v1568
        %v1570 = vrot.slane %v1563, %v1569
        %v1571 = vcombine.low %v1543, %v1550
        %v1573 = vunpack.c.l.s4 1983009808
        %v1574 = vunpack.c.0.s8 %v1573
        %v1575 = vlaneseq
        %v1576 = vshrl.u32 %v1575, 7
        %v1577 = vsub.s32 %v1574, %v1576
        %v1578 = vrot.slane %v1571, %v1577
        %v1579 = vcombine.low %v1553, %v1554
        %v1581 = vunpack.c.l.s4 1983009808
        %v1582 = vunpack.c.0.s8 %v1581
        %v1583 = vlaneseq
        %v1584 = vshrl.u32 %v1583, 7
        %v1585 = vsub.s32 %v1582, %v1584
        %v1586 = vrot.slane %v1579, %v1585
        %v1587 = vcombine.low %v1562, %v1570
        %v1588 = vcombine.high %v1562, %v1570
        %v1590 = vunpack.c.l.s4 1934713408
        %v1591 = vunpack.c.0.s8 %v1590
        %v1592 = vlaneseq
        %v1593 = vshrl.u32 %v1592, 7
        %v1594 = vsub.s32 %v1591, %v1593
        %v1595 = vrot.slane %v1587, %v1594
        %v1597 = vunpack.c.l.s4 1934713408
        %v1598 = vunpack.c.0.s8 %v1597
        %v1599 = vlaneseq
        %v1600 = vshrl.u32 %v1599, 7
        %v1601 = vsub.s32 %v1598, %v1600
        %v1602 = vrot.slane %v1588, %v1601
        %v1603 = vcombine.low %v1578, %v1586
        %v1604 = vcombine.high %v1578, %v1586
        %v1606 = vunpack.c.l.s4 1934713408
        %v1607 = vunpack.c.0.s8 %v1606
        %v1608 = vlaneseq
        %v1609 = vshrl.u32 %v1608, 7
        %v1610 = vsub.s32 %v1607, %v1609
        %v1611 = vrot.slane %v1603, %v1610
        %v1613 = vunpack.c.l.s4 1934713408
        %v1614 = vunpack.c.0.s8 %v1613
        %v1615 = vlaneseq
        %v1616 = vshrl.u32 %v1615, 7
        %v1617 = vsub.s32 %v1614, %v1616
        %v1618 = vrot.slane %v1604, %v1617
        %v1619 = vcombine.low %v1595, %v1611
        %v1620 = vcombine.high %v1595, %v1611
        %v1621 = vcombine.low %v1602, %v1618
        %v1622 = vcombine.high %v1602, %v1618
        %1624 = vrot.lane.b32.xlu0 %v1620, 32
        %v1625 = vpop.permute.xlu0 %1624
        %1628 = vrot.lane.b32.xlu0 %v1621, 64
        %v1629 = vpop.permute.xlu0 %1628
        %1632 = vrot.lane.b32.xlu0 %v1622, 96
        %v1633 = vpop.permute.xlu0 %1632
        %v1635 = vsel %vm1068, %v1619, %v1625
        %vm1636 = vcmask 523264
        %v1637 = vsel %vm1636, %v1635, %v1629
        %vm1638 = vcmask 785408
        %v1639 = vsel %vm1638, %v1637, %v1633
        %v1640 = vpack.c.bf16 %v1639, %v1639
        %v1641 = vld [vmem:[#allocation5] sm:$0xf]
        %v1642 = vld [vmem:[#allocation5 + $0x4] sm:$0xf]
        %v1643 = vld [vmem:[#allocation5 + $0x8] sm:$0xf]
        %v1644 = vld [vmem:[#allocation5 + $0xc] sm:$0xf]
        %v1645 = vld [vmem:[#allocation5 + $0x10] sm:$0xf]
        %v1646 = vld [vmem:[#allocation5 + $0x14] sm:$0xf]
        %v1647 = vld [vmem:[#allocation5 + $0x18] sm:$0xf]
        %v1648 = vld [vmem:[#allocation5 + $0x1c] sm:$0xf]
        %v1649 = vld [vmem:[#allocation5 + $0x20] sm:$0xf]
        %v1650 = vld [vmem:[#allocation5 + $0x24] sm:$0xf]
        %v1651 = vld [vmem:[#allocation5 + $0x28] sm:$0xf]
        %v1652 = vld [vmem:[#allocation5 + $0x2c] sm:$0xf]
        %v1653 = vld [vmem:[#allocation5 + $0x30] sm:$0xf]
        %v1654 = vld [vmem:[#allocation5 + $0x34] sm:$0xf]
        %v1655 = vld [vmem:[#allocation5 + $0x38] sm:$0xf]
        %v1656 = vld [vmem:[#allocation5 + $0x3c] sm:$0xf]
        %v1657 = vld [vmem:[#allocation7] sm:$0x1]
        %v1659 = vlaneseq
        %v1660 = vshrl.u32 %v1659, 7
        %v1661 = vsub.s32 0, %v1660
        %v1662 = vrot.slane %v1657, %v1661
        %v1680 = vunpack.c.l.b16 %v1641
        %v1681 = vunpack.c.l.b16 %v1642
        %v1682 = vunpack.c.l.b16 %v1643
        %v1683 = vunpack.c.l.b16 %v1644
        %v1684 = vunpack.c.l.b16 %v1645
        %v1685 = vunpack.c.l.b16 %v1646
        %v1686 = vunpack.c.l.b16 %v1647
        %v1687 = vunpack.c.l.b16 %v1648
        %v1688 = vunpack.c.l.b16 %v1649
        %v1689 = vunpack.c.l.b16 %v1650
        %v1690 = vunpack.c.l.b16 %v1651
        %v1691 = vunpack.c.l.b16 %v1652
        %v1692 = vunpack.c.l.b16 %v1653
        %v1693 = vunpack.c.l.b16 %v1654
        %v1694 = vunpack.c.l.b16 %v1655
        %v1695 = vunpack.c.l.b16 %v1656
        %v1696 = vpack.c.b16 %v1681, %v1680
        %v1697 = vpack.c.b16 %v1683, %v1682
        %v1698 = vpack.c.b16 %v1685, %v1684
        %v1699 = vpack.c.b16 %v1687, %v1686
        %v1700 = vpack.c.b16 %v1689, %v1688
        %v1701 = vpack.c.b16 %v1691, %v1690
        %v1702 = vpack.c.b16 %v1693, %v1692
        %v1703 = vpack.c.b16 %v1695, %v1694
        %1712 = vmatprep.subr.bf16.mxu0 0
        %1713 = vmatpush1.bf16.msra.mxu0 %v1696
        %1714 = vmatprep.subr.bf16.mxu0 0
        %1715 = vmatpush1.bf16.msra.mxu0 %v1697
        %1716 = vmatprep.subr.bf16.mxu0 0
        %1717 = vmatpush1.bf16.msra.mxu0 %v1698
        %1718 = vmatprep.subr.bf16.mxu0 0
        %1719 = vmatpush1.bf16.msra.mxu0 %v1699
        %1720 = vmatprep.subr.bf16.mxu0 0
        %1721 = vmatpush1.bf16.msra.mxu0 %v1700
        %1722 = vmatprep.subr.bf16.mxu0 0
        %1723 = vmatpush1.bf16.msra.mxu0 %v1701
        %1724 = vmatprep.subr.bf16.mxu0 0
        %1725 = vmatpush1.bf16.msra.mxu0 %v1702
        %1726 = vmatprep.subr.bf16.mxu0 0
        %1727 = vmatpush1.bf16.msra.mxu0 %v1703
        %1728 = vmatprep.subr.bf16.mxu0 0
        %1729 = vmatpush1.bf16.msra.mxu0 0
        %1730 = vmatprep.subr.bf16.mxu0 0
        %1731 = vmatpush1.bf16.msra.mxu0 0
        %1732 = vmatprep.subr.bf16.mxu0 0
        %1733 = vmatpush1.bf16.msra.mxu0 0
        %1734 = vmatprep.subr.bf16.mxu0 0
        %1735 = vmatpush1.bf16.msra.mxu0 0
        %1736 = vmatprep.subr.bf16.mxu0 0
        %1737 = vmatpush1.bf16.msra.mxu0 0
        %1738 = vmatprep.subr.bf16.mxu0 0
        %1739 = vmatpush1.bf16.msra.mxu0 0
        %1740 = vmatprep.subr.bf16.mxu0 0
        %1741 = vmatpush1.bf16.msra.mxu0 0
        %1742 = vmatprep.subr.bf16.mxu0 0
        %1743 = vmatpush1.bf16.msra.mxu0 0
        %1744 = vmatprep.mubr.bf16.mxu0 0
        %1745 = vmatmul.mubr.bf16.gmra.mrb[0].mxu0 %v1640
        %v1746 = vpop.f32.mrb[0].mxu0
        %v1747 = vadd.f32 %v1662, %v1746
        %v1748 = vpop.f32.mrb[0].mxu0
        %v1749 = vpop.f32.mrb[0].mxu0
        %v1750 = vpop.f32.mrb[0].mxu0
        %1751 = vdwg.mxu0
        %1752 = vst [vmem:[%s284] sm:$0xff] %v1747
        %s1753 = sand.u32 %s161, 1
        %s1754 = scalar_lea.sflag [#allocation4], %s1753
        %s1755 = sand.u32 %s161, 1
        %s1756 = smul.addr %s1755, 8
        %s1757 = scalar_lea.vmem [#allocation8], %s1756
        // Predicated region
        $region57: #{attention_forward.1} parent=43 // pred_check
          %p1758 = pneg %p171
        $region58: #{attention_forward.1} parent=43 // pred_check_branch
          %1760 = sbr.rel (%p1758) target = $region60
        $region59: #{attention_forward.1} parent=43 // pred_region
          %s1762 = ssub.s32 128, 128
          %1763 = vsyncadd %s1754, %s1762
          %s1764 = smul.addr %s22, 128
          %s1765 = scalar_lea.hbm %s6, %s1764
          %s1767 = sshll.u32 %s1757, 4
          %s1768 = int_to_ptr.vmem [resolvable:$true] %s1767
          %1770 = dma.vmem_to_hbm [thread:$0]  %s1768, 128, %s1765, %s1754
        $region60: #{attention_forward.1} parent=43 // pred_fallthru
          _
      $region44: #{attention_forward.1} parent=5 // pred_fallthru
        _
      %p1771 = scmp.le.s32.totalorder 2, %s17
      // Predicated region
      $region61: #{attention_forward.1} parent=5 // pred_check
        %p1772 = pneg %p1771
      $region62: #{attention_forward.1} parent=5 // pred_check_branch
        %1774 = sbr.rel (%p1772) target = $region64
      $region63: #{attention_forward.1} parent=5 // pred_region
        %s1775 = ssub.s32 %s17, 2
        // Predicated region
        $region65: #{attention_forward.1} parent=63 // pred_check
          %p1776 = pneg %p177
        $region66: #{attention_forward.1} parent=63 // pred_check_branch
          %1778 = sbr.rel (%p1776) target = $region68
        $region67: #{attention_forward.1} parent=63 // pred_region
          %s1779 = sand.u32 %s162, 1
          %s1780 = scalar_lea.sflag [#allocation4], %s1779
          %s1781 = sand.u32 %s162, 1
          %s1782 = smul.addr %s1781, 8
          %s1783 = scalar_lea.vmem [#allocation8], %s1782
          %1784 = dma.done %s1780, 128
        $region68: #{attention_forward.1} parent=63 // pred_fallthru
          _
      $region64: #{attention_forward.1} parent=5 // pred_fallthru
        _
    $region6: #{attention_forward.1} parent=1 // loop_footer
      %s21 = sadd.s32 1, %s17
    $region7: #{attention_forward.1} parent=1 // loop_footer_branch
      %16 = sbr.rel target = $region3
    $region8: #{attention_forward.1} parent=1 // loop_exit
      _
    %1785 = vsyncpa [#allocation3], 1
    %s1786 = scalar_lea.sflag [#allocation3], 1
    %1787 = vsyncpa %s1786, 1
    %1788 = vsyncpa [#allocation6], 1
    %1789 = vsyncpa [#allocation4], 1
    %s1790 = scalar_lea.sflag [#allocation4], 1
    %1791 = vsyncpa %s1790, 1

</llo_original>
